<compile_context>
chip_gen: v5e
topology: v5e:2x2
jax: 0.10.0
libtpu: 0.0.40
codegen_flags: <defaults>
</compile_context>

<pallas_src>
import functools

import numpy as np
import jax
import jax.numpy as jnp
from jax import lax
from jax.experimental import pallas as pl
from jax.experimental.pallas import tpu as pltpu


def _round_up(x, m):
    return -(-x // m) * m


def _ealstm_kernel(xp_ref, i_ref, w_hh_ref, h_out_ref, c_out_ref, h_sc, c_sc,
                   *, unroll):
    """Serial EA-LSTM recurrence over one (batch-tile, seq-chunk) block.

    Hp = hidden size padded to a multiple of 128 (gate slabs lane-aligned).
      xp_ref    [T, Bt, 3Hp]  precomputed x_d @ W_ih + bias (bf16/f32 stream)
      i_ref     [Bt, Hp]      static input gate (resident, f32)
      w_hh_ref  [Hp, 3Hp]     recurrent weights (resident, bf16/f32)
      h_out_ref [T, Bt, Hp]   hidden-state outputs for this chunk
      c_out_ref [T, Bt, Hp]   cell-state outputs for this chunk
      h_sc/c_sc [Bt, Hp] f32  recurrent state carried across seq chunks
    """
    T = xp_ref.shape[0]
    Hp = h_sc.shape[1]

    # First seq chunk of a batch tile -> reset the recurrent state.
    @pl.when(pl.program_id(1) == 0)
    def _():
        h_sc[...] = jnp.zeros_like(h_sc)
        c_sc[...] = jnp.zeros_like(c_sc)

    # Hoist resident loads out of the serial loop.
    i_gate = i_ref[...]
    w_hh = w_hh_ref[...]

    def step(t, carry):
        # Serial critical path: one [Bt,Hp]x[Hp,3Hp] MXU matmul (bf16 in,
        # f32 accumulate) + EUP/VPU epilogue.  Input projection and bias were
        # folded into xp_ref outside the kernel, so there is no per-step
        # bias add or x matmul here.
        gates = jnp.dot(h_sc[...].astype(w_hh.dtype), w_hh,
                        preferred_element_type=jnp.float32)
        gates = gates + xp_ref[t].astype(jnp.float32)
        # Gate layout is [f | o | g], each Hp (= k*128) lanes wide, so these
        # slices are whole-vreg selects (no XLU lane extraction).  Both
        # sigmoids run as a single EUP pass over the contiguous f|o slab.
        sig_fo = jax.nn.sigmoid(gates[:, :2 * Hp])
        tanh_g = jnp.tanh(gates[:, 2 * Hp:])
        c_1 = sig_fo[:, :Hp] * c_sc[...] + i_gate * tanh_g
        h_1 = sig_fo[:, Hp:] * jnp.tanh(c_1)
        h_sc[...] = h_1
        c_sc[...] = c_1
        # Lane-dense [Bt, Hp] slab stores (Hp is a multiple of 128).
        h_out_ref[t] = h_1.astype(h_out_ref.dtype)
        c_out_ref[t] = c_1.astype(c_out_ref.dtype)
        return carry

    # Partial unroll gives the LLO scheduler visibility across serial steps
    # (sweep: 4 on v7x, 8 on v5e/v6e).
    lax.fori_loop(0, T, step, 0, unroll=min(T, max(1, unroll)))


def _pad_gate_cols(w, H, Hp):
    """[..., 3H] -> [..., 3Hp]: each of the f/o/g blocks starts on a 128-lane
    boundary; padded columns are zero."""
    if Hp == H:
        return w
    pad = [(0, 0)] * (w.ndim - 1) + [(0, Hp - H)]
    parts = [jnp.pad(w[..., i * H:(i + 1) * H], pad) for i in range(3)]
    return jnp.concatenate(parts, axis=-1)


def ealstm_forward(x_d, x_s, w_ih, w_hh, w_sh, bias, bias_s, *,
                   batch_first=True, compute_dtype=jnp.bfloat16,
                   seq_chunk=None, batch_tile=None, unroll=4,
                   return_time_major=False):
    """EA-LSTM forward matching OrgEALSTMCell.forward semantics.

    compute_dtype: dtype of the MXU operands (h, W_hh) and the streamed x_proj
      array.  bf16 gives ~2-3x MXU throughput and halves the dominant HBM
      stream; accumulation stays f32.  Pass jnp.float32 for strict checks.
    seq_chunk / batch_tile: override the auto-derived tiling.
    return_time_major: skip the final batch-first transposes and return
      [S, B, H] (a pure HBM-bandwidth saving for consumers that accept it).
    """
    f32 = jnp.float32
    if batch_first:
        B, S, _ = x_d.shape
        x_d_tm = jnp.transpose(x_d, (1, 0, 2))    # cheap: only Dd lanes wide
    else:
        S, B, _ = x_d.shape
        x_d_tm = x_d
    H = w_hh.shape[0]
    Hp = _round_up(max(H, 128), 128)              # 128-lane aligned gate slabs
    out_dtype = x_d.dtype

    x_bytes = jnp.dtype(compute_dtype).itemsize
    o_bytes = jnp.dtype(out_dtype).itemsize

    # ---- VMEM budget / tiling (re-derived per generation) -------------
    vmem_cap = 64 * 1024 * 1024                   # conservative (v7x) fallback
    try:
        vmem_cap = int(getattr(pltpu.get_tpu_info(), "vmem_capacity_bytes",
                               vmem_cap)) or vmem_cap
    except Exception:
        pass
    # <=48 MiB on a 64 MiB-VMEM part (v7x); ~96 MiB on 128 MiB parts (v5e/v6e).
    vmem_limit = min(vmem_cap * 3 // 4, 100 * 1024 * 1024)

    if batch_tile is None:
        # Prefer >= 2 batch tiles so the "parallel" grid axis can shard across
        # TensorCores (v7x megacore); cap Bt at 256 rows.
        batch_tile = -(-B // 2) if B > 16 else B
    # Multiple of 16 keeps sub-32-bit (bf16) blocks sublane-tileable.
    Bt = min(_round_up(max(int(batch_tile), 1), 16), _round_up(B, 16), 256)

    if seq_chunk is None:
        resident = (2 * Hp * 3 * Hp * x_bytes      # W_hh (double-buffered)
                    + 2 * Bt * Hp * 4              # i_gate (double-buffered)
                    + 2 * Bt * Hp * 4)             # h/c scratch
        per_t = 2 * Bt * Hp * (3 * x_bytes + 2 * o_bytes)  # streamed, x2 bufs
        seq_chunk = max(8, (int(vmem_limit * 0.7) - resident) // max(per_t, 1))
    T = max(1, min(int(seq_chunk), S, 256))

    n_b = -(-B // Bt)
    n_s = -(-S // T)
    B_pad, S_pad = n_b * Bt, n_s * T

    # ---- parameter relayout (gate slabs aligned to 128 lanes) ---------
    w_ih_p = _pad_gate_cols(w_ih.astype(f32), H, Hp)
    bias_p = _pad_gate_cols(bias.astype(f32), H, Hp)
    w_hh_p = _pad_gate_cols(w_hh.astype(f32), H, Hp)
    if Hp != H:
        w_hh_p = jnp.pad(w_hh_p, ((0, Hp - H), (0, 0)))      # zero rows
        w_sh_p = jnp.pad(w_sh.astype(f32), ((0, 0), (0, Hp - H)))
        bias_s_p = jnp.pad(bias_s.astype(f32), ((0, Hp - H),))
    else:
        w_sh_p = w_sh.astype(f32)
        bias_s_p = bias_s.astype(f32)

    # ---- one-off XLA compute, hoisted off the serial critical path ----
    # Pad the *narrow* inputs first, so no wide (3Hp) array is ever re-padded.
    # Padded batch rows / time steps see finite (bias-only) gates and are
    # sliced off below; padded hidden columns stay exactly 0 because their
    # W_hh rows/cols, x_proj cols and bias entries are all zero.
    if B_pad != B:
        x_s = jnp.pad(x_s, ((0, B_pad - B), (0, 0)))
    if B_pad != B or S_pad != S:
        x_d_tm = jnp.pad(x_d_tm, ((0, S_pad - S), (0, B_pad - B), (0, 0)))

    # Static input gate i = sigmoid(x_s @ W_sh + b_s)  (f32, VMEM-resident).
    i_gate = jax.nn.sigmoid(
        jnp.dot(x_s.astype(f32), w_sh_p, preferred_element_type=f32)
        + bias_s_p[None, :])

    # Input projection for the whole sequence, emitted time-major directly
    # and streamed to the kernel in compute_dtype (bf16 halves the DMA bytes).
    x_proj = (jnp.einsum('sbd,dg->sbg', x_d_tm.astype(f32), w_ih_p,
                         preferred_element_type=f32)
              + bias_p[None, None, :]).astype(compute_dtype)

    kernel = functools.partial(_ealstm_kernel, unroll=unroll)
    h_tm, c_tm = pl.pallas_call(
        kernel,
        out_shape=(jax.ShapeDtypeStruct((S_pad, B_pad, Hp), out_dtype),
                   jax.ShapeDtypeStruct((S_pad, B_pad, Hp), out_dtype)),
        grid=(n_b, n_s),
        in_specs=[
            # Streamed x_proj chunk (double-buffered by the pipeline).
            pl.BlockSpec((T, Bt, 3 * Hp), lambda b, c: (c, b, 0)),
            # Resident operands (constant index maps).
            # TODO(synk): pipeline_mode=pl.Buffered(1) here would drop their
            # second VMEM buffer once single-buffered specs are supported in
            # top-level pallas_call pipelining.
            pl.BlockSpec((Bt, Hp), lambda b, c: (b, 0)),          # i_gate
            pl.BlockSpec((Hp, 3 * Hp), lambda b, c: (0, 0)),      # W_hh
        ],
        out_specs=(pl.BlockSpec((T, Bt, Hp), lambda b, c: (c, b, 0)),
                   pl.BlockSpec((T, Bt, Hp), lambda b, c: (c, b, 0))),
        scratch_shapes=[pltpu.VMEM((Bt, Hp), jnp.float32),
                        pltpu.VMEM((Bt, Hp), jnp.float32)],
        compiler_params=pltpu.CompilerParams(
            dimension_semantics=("parallel", "arbitrary"),
            vmem_limit_bytes=int(vmem_limit)),
    )(x_proj, i_gate, w_hh_p.astype(compute_dtype))

    h_tm = h_tm[:S, :B, :H]
    c_tm = c_tm[:S, :B, :H]
    if return_time_major or not batch_first:
        return h_tm, c_tm
    # TODO(synk): consumers that accept time-major [S,B,H] avoid these two
    # HBM round-trips entirely (pass return_time_major=True).
    return jnp.transpose(h_tm, (1, 0, 2)), jnp.transpose(c_tm, (1, 0, 2))


def ealstm_reference(x_d, x_s, w_ih, w_hh, w_sh, bias, bias_s, *,
                     batch_first=True):
    """Pure-JAX reference mirroring the PyTorch loop exactly (f32)."""
    if batch_first:
        x_d = jnp.transpose(x_d, (1, 0, 2))
    S, B, _ = x_d.shape
    H = w_hh.shape[0]
    h = jnp.zeros((B, H), jnp.float32)
    c = jnp.zeros((B, H), jnp.float32)
    i = jax.nn.sigmoid(x_s @ w_sh + bias_s[None, :])
    hs, cs = [], []
    for t in range(S):
        gates = h @ w_hh + bias[None, :] + x_d[t] @ w_ih
        f, o, g = gates[:, :H], gates[:, H:2 * H], gates[:, 2 * H:]
        c = jax.nn.sigmoid(f) * c + i * jnp.tanh(g)
        h = jax.nn.sigmoid(o) * jnp.tanh(c)
        hs.append(h)
        cs.append(c)
    h_n = jnp.stack(hs, 0)
    c_n = jnp.stack(cs, 0)
    if batch_first:
        h_n = jnp.transpose(h_n, (1, 0, 2))
        c_n = jnp.transpose(c_n, (1, 0, 2))
    return h_n, c_n


if __name__ == "__main__":
    # Small deterministic problem (mirrors OrgEALSTMCell.__init__ / forward).
    # B=32 with batch_tile=16 -> 2 batch tiles (exercises the parallel axis);
    # S=10 with seq_chunk=4 -> 3 seq chunks including sequence padding.
    B, S = 32, 10
    input_size_dyn, input_size_stat, hidden_size = 8, 4, 32
    initial_forget_bias = 0

    key = jax.random.PRNGKey(0)
    k1, k2, k3, k4 = jax.random.split(key, 4)

    # Deterministic parameter init matching reset_parameters():
    ortho = jax.nn.initializers.orthogonal()
    w_ih = ortho(k1, (input_size_dyn, 3 * hidden_size), jnp.float32)
    w_sh = ortho(k2, (input_size_stat, hidden_size), jnp.float32)
    w_hh = jnp.tile(jnp.eye(hidden_size, dtype=jnp.float32), (1, 3))
    bias = jnp.zeros((3 * hidden_size,), jnp.float32)
    if initial_forget_bias != 0:
        bias = bias.at[:hidden_size].set(float(initial_forget_bias))
    bias_s = jnp.zeros((hidden_size,), jnp.float32)

    # Inputs (batch_first=True): x_d [B, S, Dd], x_s [B, Ds]
    x_d = jax.random.normal(k3, (B, S, input_size_dyn), jnp.float32)
    x_s = jax.random.normal(k4, (B, input_size_stat), jnp.float32)

    h_ref, c_ref = ealstm_reference(x_d, x_s, w_ih, w_hh, w_sh, bias, bias_s)

    # f32 MXU path: strict correctness check against the pure-JAX reference.
    h32, c32 = ealstm_forward(x_d, x_s, w_ih, w_hh, w_sh, bias, bias_s,
                              compute_dtype=jnp.float32,
                              seq_chunk=4, batch_tile=16)
    jax.block_until_ready((h32, c32))
    np.testing.assert_allclose(np.asarray(h32), np.asarray(h_ref),
                               rtol=1e-4, atol=1e-4)
    np.testing.assert_allclose(np.asarray(c32), np.asarray(c_ref),
                               rtol=1e-4, atol=1e-4)

    # Default (performance) path: bf16 MXU operands + bf16 x_proj stream.
    # Loose sanity check (bf16 quantization accumulates over the recurrence).
    h_n, c_n = ealstm_forward(x_d, x_s, w_ih, w_hh, w_sh, bias, bias_s,
                              seq_chunk=4, batch_tile=16)
    jax.block_until_ready((h_n, c_n))
    np.testing.assert_allclose(np.asarray(h_n), np.asarray(h_ref),
                               rtol=1e-1, atol=1e-1)
    np.testing.assert_allclose(np.asarray(c_n), np.asarray(c_ref),
                               rtol=1e-1, atol=1e-1)

    assert h_n.shape == (B, S, hidden_size)
    assert c_n.shape == (B, S, hidden_size)
    assert h_n.dtype == x_d.dtype
    print("KERNEL_OK")
</pallas_src>

<mosaic_0001>
module attributes {stable_mosaic.version = 11 : i64} {
  func.func @_ealstm_kernel(%arg0: i32, %arg1: i32, %arg2: memref<4x16x384xf32, #tpu.memory_space<vmem>>, %arg3: memref<16x128xf32, #tpu.memory_space<vmem>>, %arg4: memref<128x384xf32, #tpu.memory_space<vmem>>, %arg5: memref<4x16x128xf32, #tpu.memory_space<vmem>>, %arg6: memref<4x16x128xf32, #tpu.memory_space<vmem>>, %arg7: memref<16x128xf32, #tpu.memory_space<vmem>>, %arg8: memref<16x128xf32, #tpu.memory_space<vmem>>) attributes {dimension_semantics = [#tpu.dimension_semantics<parallel>, #tpu.dimension_semantics<arbitrary>], iteration_bounds = array<i64: 2, 3>, scalar_prefetch = 0 : i64, scratch_operands = 2 : i64, tpu.core_type = #tpu.core_type<tc>, window_params = [{transform_indices = @transform_0, window_bounds = array<i64: 4, 16, 384>}, {transform_indices = @transform_1, window_bounds = array<i64: 16, 128>}, {pipeline_mode = #tpu.pipeline_mode<synchronous>, transform_indices = @transform_2, window_bounds = array<i64: 128, 384>}, {transform_indices = @transform_3, window_bounds = array<i64: 4, 16, 128>}, {transform_indices = @transform_4, window_bounds = array<i64: 4, 16, 128>}]} {
    %c0_i32 = arith.constant 0 : i32
    %0 = arith.cmpi eq, %arg1, %c0_i32 : i32
    %1 = arith.extui %0 : i1 to i32
    %c0_i32_0 = arith.constant 0 : i32
    %2 = arith.cmpi ne, %1, %c0_i32_0 : i32
    scf.if %2 {
      %cst_68 = arith.constant 0.000000e+00 : f32
      %133 = vector.broadcast %cst_68 : f32 to vector<16x128xf32>
      %c0_69 = arith.constant 0 : index
      %c0_70 = arith.constant 0 : index
      %134 = vector.load %arg7[%c0_69, %c0_70] : memref<16x128xf32, #tpu.memory_space<vmem>>, vector<16x128xf32>
      tpu.vector_store %arg7[%c0_69, %c0_70], %133 {strides = array<i32>} : memref<16x128xf32, #tpu.memory_space<vmem>>, vector<16x128xf32>,
      %cst_71 = arith.constant 0.000000e+00 : f32
      %135 = vector.broadcast %cst_71 : f32 to vector<16x128xf32>
      %c0_72 = arith.constant 0 : index
      %c0_73 = arith.constant 0 : index
      %136 = vector.load %arg8[%c0_72, %c0_73] : memref<16x128xf32, #tpu.memory_space<vmem>>, vector<16x128xf32>
      tpu.vector_store %arg8[%c0_72, %c0_73], %135 {strides = array<i32>} : memref<16x128xf32, #tpu.memory_space<vmem>>, vector<16x128xf32>,
    } else {
    }
    %c0 = arith.constant 0 : index
    %c0_1 = arith.constant 0 : index
    %3 = vector.load %arg3[%c0, %c0_1] : memref<16x128xf32, #tpu.memory_space<vmem>>, vector<16x128xf32>
    %c0_2 = arith.constant 0 : index
    %c0_3 = arith.constant 0 : index
    %4 = vector.load %arg4[%c0_2, %c0_3] : memref<128x384xf32, #tpu.memory_space<vmem>>, vector<128x384xf32>
    %c0_i32_4 = arith.constant 0 : i32
    %c0_5 = arith.constant 0 : index
    %c0_6 = arith.constant 0 : index
    %5 = vector.load %arg7[%c0_5, %c0_6] : memref<16x128xf32, #tpu.memory_space<vmem>>, vector<16x128xf32>
    %cst = arith.constant dense<0.000000e+00> : vector<16x384xf32>
    %6 = tpu.matmul %5, %4, %cst {dimension_numbers = #tpu.dot_dimension_numbers<[1], [0], [0], [1], [0, 0, 1, 1], [], []>} : vector<16x128xf32>, vector<128x384xf32>, vector<16x384xf32> -> vector<16x384xf32>
    %7 = arith.index_cast %c0_i32_4 : i32 to index
    %c0_7 = arith.constant 0 : index
    %c0_8 = arith.constant 0 : index
    %8 = vector.load %arg2[%7, %c0_7, %c0_8] : memref<4x16x384xf32, #tpu.memory_space<vmem>>, vector<1x16x384xf32>
    %9 = vector.shape_cast %8 : vector<1x16x384xf32> to vector<16x384xf32>
    %10 = arith.addf %6, %9 : vector<16x384xf32>
    %11 = vector.extract_strided_slice %10 {offsets = [0, 0], sizes = [16, 256], strides = [1, 1]} : vector<16x384xf32> to vector<16x256xf32>
    %12 = arith.negf %11 : vector<16x256xf32>
    %13 = math.exp %12 : vector<16x256xf32>
    %cst_9 = arith.constant 1.000000e+00 : f32
    %14 = vector.broadcast %cst_9 : f32 to vector<16x256xf32>
    %15 = arith.addf %14, %13 : vector<16x256xf32>
    %16 = arith.divf %14, %15 : vector<16x256xf32>
    %17 = vector.extract_strided_slice %10 {offsets = [0, 256], sizes = [16, 128], strides = [1, 1]} : vector<16x384xf32> to vector<16x128xf32>
    %18 = math.tanh %17 : vector<16x128xf32>
    %19 = vector.extract_strided_slice %16 {offsets = [0, 0], sizes = [16, 128], strides = [1, 1]} : vector<16x256xf32> to vector<16x128xf32>
    %c0_10 = arith.constant 0 : index
    %c0_11 = arith.constant 0 : index
    %20 = vector.load %arg8[%c0_10, %c0_11] : memref<16x128xf32, #tpu.memory_space<vmem>>, vector<16x128xf32>
    %21 = arith.mulf %19, %20 : vector<16x128xf32>
    %22 = arith.mulf %3, %18 : vector<16x128xf32>
    %23 = arith.addf %21, %22 : vector<16x128xf32>
    %24 = vector.extract_strided_slice %16 {offsets = [0, 128], sizes = [16, 128], strides = [1, 1]} : vector<16x256xf32> to vector<16x128xf32>
    %25 = math.tanh %23 : vector<16x128xf32>
    %26 = arith.mulf %24, %25 : vector<16x128xf32>
    %c0_12 = arith.constant 0 : index
    %c0_13 = arith.constant 0 : index
    %27 = vector.load %arg7[%c0_12, %c0_13] : memref<16x128xf32, #tpu.memory_space<vmem>>, vector<16x128xf32>
    tpu.vector_store %arg7[%c0_12, %c0_13], %26 {strides = array<i32>} : memref<16x128xf32, #tpu.memory_space<vmem>>, vector<16x128xf32>,
    %c0_14 = arith.constant 0 : index
    %c0_15 = arith.constant 0 : index
    %28 = vector.load %arg8[%c0_14, %c0_15] : memref<16x128xf32, #tpu.memory_space<vmem>>, vector<16x128xf32>
    tpu.vector_store %arg8[%c0_14, %c0_15], %23 {strides = array<i32>} : memref<16x128xf32, #tpu.memory_space<vmem>>, vector<16x128xf32>,
    %29 = arith.index_cast %c0_i32_4 : i32 to index
    %c0_16 = arith.constant 0 : index
    %c0_17 = arith.constant 0 : index
    %30 = vector.load %arg5[%29, %c0_16, %c0_17] : memref<4x16x128xf32, #tpu.memory_space<vmem>>, vector<1x16x128xf32>
    %31 = vector.shape_cast %30 : vector<1x16x128xf32> to vector<16x128xf32>
    %32 = vector.shape_cast %26 : vector<16x128xf32> to vector<1x16x128xf32>
    tpu.vector_store %arg5[%29, %c0_16, %c0_17], %32 {strides = array<i32>} : memref<4x16x128xf32, #tpu.memory_space<vmem>>, vector<1x16x128xf32>,
    %33 = arith.index_cast %c0_i32_4 : i32 to index
    %c0_18 = arith.constant 0 : index
    %c0_19 = arith.constant 0 : index
    %34 = vector.load %arg6[%33, %c0_18, %c0_19] : memref<4x16x128xf32, #tpu.memory_space<vmem>>, vector<1x16x128xf32>
    %35 = vector.shape_cast %34 : vector<1x16x128xf32> to vector<16x128xf32>
    %36 = vector.shape_cast %23 : vector<16x128xf32> to vector<1x16x128xf32>
    tpu.vector_store %arg6[%33, %c0_18, %c0_19], %36 {strides = array<i32>} : memref<4x16x128xf32, #tpu.memory_space<vmem>>, vector<1x16x128xf32>,
    %c1_i32 = arith.constant 1 : i32
    %c0_20 = arith.constant 0 : index
    %c0_21 = arith.constant 0 : index
    %37 = vector.load %arg7[%c0_20, %c0_21] : memref<16x128xf32, #tpu.memory_space<vmem>>, vector<16x128xf32>
    %cst_22 = arith.constant dense<0.000000e+00> : vector<16x384xf32>
    %38 = tpu.matmul %37, %4, %cst_22 {dimension_numbers = #tpu.dot_dimension_numbers<[1], [0], [0], [1], [0, 0, 1, 1], [], []>} : vector<16x128xf32>, vector<128x384xf32>, vector<16x384xf32> -> vector<16x384xf32>
    %39 = arith.index_cast %c1_i32 : i32 to index
    %c0_23 = arith.constant 0 : index
    %c0_24 = arith.constant 0 : index
    %40 = vector.load %arg2[%39, %c0_23, %c0_24] : memref<4x16x384xf32, #tpu.memory_space<vmem>>, vector<1x16x384xf32>
    %41 = vector.shape_cast %40 : vector<1x16x384xf32> to vector<16x384xf32>
    %42 = arith.addf %38, %41 : vector<16x384xf32>
    %43 = vector.extract_strided_slice %42 {offsets = [0, 0], sizes = [16, 256], strides = [1, 1]} : vector<16x384xf32> to vector<16x256xf32>
    %44 = arith.negf %43 : vector<16x256xf32>
    %45 = math.exp %44 : vector<16x256xf32>
    %cst_25 = arith.constant 1.000000e+00 : f32
    %46 = vector.broadcast %cst_25 : f32 to vector<16x256xf32>
    %47 = arith.addf %46, %45 : vector<16x256xf32>
    %48 = arith.divf %46, %47 : vector<16x256xf32>
    %49 = vector.extract_strided_slice %42 {offsets = [0, 256], sizes = [16, 128], strides = [1, 1]} : vector<16x384xf32> to vector<16x128xf32>
    %50 = math.tanh %49 : vector<16x128xf32>
    %51 = vector.extract_strided_slice %48 {offsets = [0, 0], sizes = [16, 128], strides = [1, 1]} : vector<16x256xf32> to vector<16x128xf32>
    %c0_26 = arith.constant 0 : index
    %c0_27 = arith.constant 0 : index
    %52 = vector.load %arg8[%c0_26, %c0_27] : memref<16x128xf32, #tpu.memory_space<vmem>>, vector<16x128xf32>
    %53 = arith.mulf %51, %52 : vector<16x128xf32>
    %54 = arith.mulf %3, %50 : vector<16x128xf32>
    %55 = arith.addf %53, %54 : vector<16x128xf32>
    %56 = vector.extract_strided_slice %48 {offsets = [0, 128], sizes = [16, 128], strides = [1, 1]} : vector<16x256xf32> to vector<16x128xf32>
    %57 = math.tanh %55 : vector<16x128xf32>
    %58 = arith.mulf %56, %57 : vector<16x128xf32>
    %c0_28 = arith.constant 0 : index
    %c0_29 = arith.constant 0 : index
    %59 = vector.load %arg7[%c0_28, %c0_29] : memref<16x128xf32, #tpu.memory_space<vmem>>, vector<16x128xf32>
    tpu.vector_store %arg7[%c0_28, %c0_29], %58 {strides = array<i32>} : memref<16x128xf32, #tpu.memory_space<vmem>>, vector<16x128xf32>,
    %c0_30 = arith.constant 0 : index
    %c0_31 = arith.constant 0 : index
    %60 = vector.load %arg8[%c0_30, %c0_31] : memref<16x128xf32, #tpu.memory_space<vmem>>, vector<16x128xf32>
    tpu.vector_store %arg8[%c0_30, %c0_31], %55 {strides = array<i32>} : memref<16x128xf32, #tpu.memory_space<vmem>>, vector<16x128xf32>,
    %61 = arith.index_cast %c1_i32 : i32 to index
    %c0_32 = arith.constant 0 : index
    %c0_33 = arith.constant 0 : index
    %62 = vector.load %arg5[%61, %c0_32, %c0_33] : memref<4x16x128xf32, #tpu.memory_space<vmem>>, vector<1x16x128xf32>
    %63 = vector.shape_cast %62 : vector<1x16x128xf32> to vector<16x128xf32>
    %64 = vector.shape_cast %58 : vector<16x128xf32> to vector<1x16x128xf32>
    tpu.vector_store %arg5[%61, %c0_32, %c0_33], %64 {strides = array<i32>} : memref<4x16x128xf32, #tpu.memory_space<vmem>>, vector<1x16x128xf32>,
    %65 = arith.index_cast %c1_i32 : i32 to index
    %c0_34 = arith.constant 0 : index
    %c0_35 = arith.constant 0 : index
    %66 = vector.load %arg6[%65, %c0_34, %c0_35] : memref<4x16x128xf32, #tpu.memory_space<vmem>>, vector<1x16x128xf32>
    %67 = vector.shape_cast %66 : vector<1x16x128xf32> to vector<16x128xf32>
    %68 = vector.shape_cast %55 : vector<16x128xf32> to vector<1x16x128xf32>
    tpu.vector_store %arg6[%65, %c0_34, %c0_35], %68 {strides = array<i32>} : memref<4x16x128xf32, #tpu.memory_space<vmem>>, vector<1x16x128xf32>,
    %c2_i32 = arith.constant 2 : i32
    %c0_36 = arith.constant 0 : index
    %c0_37 = arith.constant 0 : index
    %69 = vector.load %arg7[%c0_36, %c0_37] : memref<16x128xf32, #tpu.memory_space<vmem>>, vector<16x128xf32>
    %cst_38 = arith.constant dense<0.000000e+00> : vector<16x384xf32>
    %70 = tpu.matmul %69, %4, %cst_38 {dimension_numbers = #tpu.dot_dimension_numbers<[1], [0], [0], [1], [0, 0, 1, 1], [], []>} : vector<16x128xf32>, vector<128x384xf32>, vector<16x384xf32> -> vector<16x384xf32>
    %71 = arith.index_cast %c2_i32 : i32 to index
    %c0_39 = arith.constant 0 : index
    %c0_40 = arith.constant 0 : index
    %72 = vector.load %arg2[%71, %c0_39, %c0_40] : memref<4x16x384xf32, #tpu.memory_space<vmem>>, vector<1x16x384xf32>
    %73 = vector.shape_cast %72 : vector<1x16x384xf32> to vector<16x384xf32>
    %74 = arith.addf %70, %73 : vector<16x384xf32>
    %75 = vector.extract_strided_slice %74 {offsets = [0, 0], sizes = [16, 256], strides = [1, 1]} : vector<16x384xf32> to vector<16x256xf32>
    %76 = arith.negf %75 : vector<16x256xf32>
    %77 = math.exp %76 : vector<16x256xf32>
    %cst_41 = arith.constant 1.000000e+00 : f32
    %78 = vector.broadcast %cst_41 : f32 to vector<16x256xf32>
    %79 = arith.addf %78, %77 : vector<16x256xf32>
    %80 = arith.divf %78, %79 : vector<16x256xf32>
    %81 = vector.extract_strided_slice %74 {offsets = [0, 256], sizes = [16, 128], strides = [1, 1]} : vector<16x384xf32> to vector<16x128xf32>
    %82 = math.tanh %81 : vector<16x128xf32>
    %83 = vector.extract_strided_slice %80 {offsets = [0, 0], sizes = [16, 128], strides = [1, 1]} : vector<16x256xf32> to vector<16x128xf32>
    %c0_42 = arith.constant 0 : index
    %c0_43 = arith.constant 0 : index
    %84 = vector.load %arg8[%c0_42, %c0_43] : memref<16x128xf32, #tpu.memory_space<vmem>>, vector<16x128xf32>
    %85 = arith.mulf %83, %84 : vector<16x128xf32>
    %86 = arith.mulf %3, %82 : vector<16x128xf32>
    %87 = arith.addf %85, %86 : vector<16x128xf32>
    %88 = vector.extract_strided_slice %80 {offsets = [0, 128], sizes = [16, 128], strides = [1, 1]} : vector<16x256xf32> to vector<16x128xf32>
    %89 = math.tanh %87 : vector<16x128xf32>
    %90 = arith.mulf %88, %89 : vector<16x128xf32>
    %c0_44 = arith.constant 0 : index
    %c0_45 = arith.constant 0 : index
    %91 = vector.load %arg7[%c0_44, %c0_45] : memref<16x128xf32, #tpu.memory_space<vmem>>, vector<16x128xf32>
    tpu.vector_store %arg7[%c0_44, %c0_45], %90 {strides = array<i32>} : memref<16x128xf32, #tpu.memory_space<vmem>>, vector<16x128xf32>,
    %c0_46 = arith.constant 0 : index
    %c0_47 = arith.constant 0 : index
    %92 = vector.load %arg8[%c0_46, %c0_47] : memref<16x128xf32, #tpu.memory_space<vmem>>, vector<16x128xf32>
    tpu.vector_store %arg8[%c0_46, %c0_47], %87 {strides = array<i32>} : memref<16x128xf32, #tpu.memory_space<vmem>>, vector<16x128xf32>,
    %93 = arith.index_cast %c2_i32 : i32 to index
    %c0_48 = arith.constant 0 : index
    %c0_49 = arith.constant 0 : index
    %94 = vector.load %arg5[%93, %c0_48, %c0_49] : memref<4x16x128xf32, #tpu.memory_space<vmem>>, vector<1x16x128xf32>
    %95 = vector.shape_cast %94 : vector<1x16x128xf32> to vector<16x128xf32>
    %96 = vector.shape_cast %90 : vector<16x128xf32> to vector<1x16x128xf32>
    tpu.vector_store %arg5[%93, %c0_48, %c0_49], %96 {strides = array<i32>} : memref<4x16x128xf32, #tpu.memory_space<vmem>>, vector<1x16x128xf32>,
    %97 = arith.index_cast %c2_i32 : i32 to index
    %c0_50 = arith.constant 0 : index
    %c0_51 = arith.constant 0 : index
    %98 = vector.load %arg6[%97, %c0_50, %c0_51] : memref<4x16x128xf32, #tpu.memory_space<vmem>>, vector<1x16x128xf32>
    %99 = vector.shape_cast %98 : vector<1x16x128xf32> to vector<16x128xf32>
    %100 = vector.shape_cast %87 : vector<16x128xf32> to vector<1x16x128xf32>
    tpu.vector_store %arg6[%97, %c0_50, %c0_51], %100 {strides = array<i32>} : memref<4x16x128xf32, #tpu.memory_space<vmem>>, vector<1x16x128xf32>,
    %c3_i32 = arith.constant 3 : i32
    %c0_52 = arith.constant 0 : index
    %c0_53 = arith.constant 0 : index
    %101 = vector.load %arg7[%c0_52, %c0_53] : memref<16x128xf32, #tpu.memory_space<vmem>>, vector<16x128xf32>
    %cst_54 = arith.constant dense<0.000000e+00> : vector<16x384xf32>
    %102 = tpu.matmul %101, %4, %cst_54 {dimension_numbers = #tpu.dot_dimension_numbers<[1], [0], [0], [1], [0, 0, 1, 1], [], []>} : vector<16x128xf32>, vector<128x384xf32>, vector<16x384xf32> -> vector<16x384xf32>
    %103 = arith.index_cast %c3_i32 : i32 to index
    %c0_55 = arith.constant 0 : index
    %c0_56 = arith.constant 0 : index
    %104 = vector.load %arg2[%103, %c0_55, %c0_56] : memref<4x16x384xf32, #tpu.memory_space<vmem>>, vector<1x16x384xf32>
    %105 = vector.shape_cast %104 : vector<1x16x384xf32> to vector<16x384xf32>
    %106 = arith.addf %102, %105 : vector<16x384xf32>
    %107 = vector.extract_strided_slice %106 {offsets = [0, 0], sizes = [16, 256], strides = [1, 1]} : vector<16x384xf32> to vector<16x256xf32>
    %108 = arith.negf %107 : vector<16x256xf32>
    %109 = math.exp %108 : vector<16x256xf32>
    %cst_57 = arith.constant 1.000000e+00 : f32
    %110 = vector.broadcast %cst_57 : f32 to vector<16x256xf32>
    %111 = arith.addf %110, %109 : vector<16x256xf32>
    %112 = arith.divf %110, %111 : vector<16x256xf32>
    %113 = vector.extract_strided_slice %106 {offsets = [0, 256], sizes = [16, 128], strides = [1, 1]} : vector<16x384xf32> to vector<16x128xf32>
    %114 = math.tanh %113 : vector<16x128xf32>
    %115 = vector.extract_strided_slice %112 {offsets = [0, 0], sizes = [16, 128], strides = [1, 1]} : vector<16x256xf32> to vector<16x128xf32>
    %c0_58 = arith.constant 0 : index
    %c0_59 = arith.constant 0 : index
    %116 = vector.load %arg8[%c0_58, %c0_59] : memref<16x128xf32, #tpu.memory_space<vmem>>, vector<16x128xf32>
    %117 = arith.mulf %115, %116 : vector<16x128xf32>
    %118 = arith.mulf %3, %114 : vector<16x128xf32>
    %119 = arith.addf %117, %118 : vector<16x128xf32>
    %120 = vector.extract_strided_slice %112 {offsets = [0, 128], sizes = [16, 128], strides = [1, 1]} : vector<16x256xf32> to vector<16x128xf32>
    %121 = math.tanh %119 : vector<16x128xf32>
    %122 = arith.mulf %120, %121 : vector<16x128xf32>
    %c0_60 = arith.constant 0 : index
    %c0_61 = arith.constant 0 : index
    %123 = vector.load %arg7[%c0_60, %c0_61] : memref<16x128xf32, #tpu.memory_space<vmem>>, vector<16x128xf32>
    tpu.vector_store %arg7[%c0_60, %c0_61], %122 {strides = array<i32>} : memref<16x128xf32, #tpu.memory_space<vmem>>, vector<16x128xf32>,
    %c0_62 = arith.constant 0 : index
    %c0_63 = arith.constant 0 : index
    %124 = vector.load %arg8[%c0_62, %c0_63] : memref<16x128xf32, #tpu.memory_space<vmem>>, vector<16x128xf32>
    tpu.vector_store %arg8[%c0_62, %c0_63], %119 {strides = array<i32>} : memref<16x128xf32, #tpu.memory_space<vmem>>, vector<16x128xf32>,
    %125 = arith.index_cast %c3_i32 : i32 to index
    %c0_64 = arith.constant 0 : index
    %c0_65 = arith.constant 0 : index
    %126 = vector.load %arg5[%125, %c0_64, %c0_65] : memref<4x16x128xf32, #tpu.memory_space<vmem>>, vector<1x16x128xf32>
    %127 = vector.shape_cast %126 : vector<1x16x128xf32> to vector<16x128xf32>
    %128 = vector.shape_cast %122 : vector<16x128xf32> to vector<1x16x128xf32>
    tpu.vector_store %arg5[%125, %c0_64, %c0_65], %128 {strides = array<i32>} : memref<4x16x128xf32, #tpu.memory_space<vmem>>, vector<1x16x128xf32>,
    %129 = arith.index_cast %c3_i32 : i32 to index
    %c0_66 = arith.constant 0 : index
    %c0_67 = arith.constant 0 : index
    %130 = vector.load %arg6[%129, %c0_66, %c0_67] : memref<4x16x128xf32, #tpu.memory_space<vmem>>, vector<1x16x128xf32>
    %131 = vector.shape_cast %130 : vector<1x16x128xf32> to vector<16x128xf32>
    %132 = vector.shape_cast %119 : vector<16x128xf32> to vector<1x16x128xf32>
    tpu.vector_store %arg6[%129, %c0_66, %c0_67], %132 {strides = array<i32>} : memref<4x16x128xf32, #tpu.memory_space<vmem>>, vector<1x16x128xf32>,
    %c4_i32 = arith.constant 4 : i32
    return
  }
  func.func @transform_0(%arg0: i32, %arg1: i32) -> (i32, i32, i32) {
    %c0_i32 = arith.constant 0 : i32
    %c0_i32_0 = arith.constant 0 : i32
    return %arg1, %arg0, %c0_i32 : i32, i32, i32
  }
  func.func @transform_1(%arg0: i32, %arg1: i32) -> (i32, i32) {
    %c0_i32 = arith.constant 0 : i32
    %c0_i32_0 = arith.constant 0 : i32
    return %arg0, %c0_i32 : i32, i32
  }
  func.func @transform_2(%arg0: i32, %arg1: i32) -> (i32, i32) {
    %c0_i32 = arith.constant 0 : i32
    %c0_i32_0 = arith.constant 0 : i32
    %c0_i32_1 = arith.constant 0 : i32
    return %c0_i32, %c0_i32_0 : i32, i32
  }
  func.func @transform_3(%arg0: i32, %arg1: i32) -> (i32, i32, i32) {
    %c0_i32 = arith.constant 0 : i32
    %c0_i32_0 = arith.constant 0 : i32
    return %arg1, %arg0, %c0_i32 : i32, i32, i32
  }
  func.func @transform_4(%arg0: i32, %arg1: i32) -> (i32, i32, i32) {
    %c0_i32 = arith.constant 0 : i32
    %c0_i32_0 = arith.constant 0 : i32
    return %arg1, %arg0, %c0_i32 : i32, i32, i32
  }
}

</mosaic_0001>

<llo_original>
// kernel: tpu_custom_call.1
$region0: #{tpu_custom_call.1}
  #allocation0 [shape = 'u32[]', space=smem, size = 0x4, offset = 0x4, fixed_abs, tag = 'smem constant byte address 0x4 - core index']
  #allocation1 [shape = 'u32[72,128]{1,0:T(1,128)}', space=vmem, size = 0x9000, scoped, tag = 'internal scratch']
  #allocation2 [shape = 'f32[16,128]{1,0:T(8,128)}', space=vmem, size = 0x2000, scoped, tag = 'scratch operand']
  #allocation3 [shape = 'f32[16,128]{1,0:T(8,128)}', space=vmem, size = 0x2000, scoped, tag = 'scratch operand']
  #allocation13 [shape = 's32[]', space=sflag, size = 0x4, offset = 0, fixed_abs, tag = 'sflag constant byte address 0x0 - dummy sync flag']
  #allocation15 [shape = 's32[]', space=sflag, size = 0x4, offset = 0, fixed_abs, tag = 'sflag constant byte address 0x0 - dummy sync flag']
  #allocation17 [shape = 's32[]', space=sflag, size = 0x4, offset = 0, fixed_abs, tag = 'sflag constant byte address 0x0 - dummy sync flag']
  %s0 = inlined_call_operand.hbm [shape: f32[12,32,384], index: 0, kind: input, shape index: {}]
  %s1 = inlined_call_operand.hbm [shape: f32[32,128], index: 1, kind: input, shape index: {}]
  %s2 = inlined_call_operand.hbm [shape: f32[128,384], index: 2, kind: input, shape index: {}]
  %s3 = inlined_call_operand.hbm [shape: f32[12,32,128], index: 3, kind: output, shape index: {0}]
  %s4 = inlined_call_operand.hbm [shape: f32[12,32,128], index: 4, kind: output, shape index: {1}]
  %5 = xla_tuple %s3, %s4
  %s6 = sld [smem:[#allocation0]]
  $region69: #{tpu_custom_call.1} parent=0
    _
  %s8 = ssub.s32 1, %s6
  %s9 = scalar_select 0, %s8, %s6
  $region1: #{tpu_custom_call.1} parent=0
    #allocation4 [shape = 'u8[196608]{0}', space=vmem, size = 0x30000, scoped, tag = 'input window, operand 0']
    #allocation5 [shape = 's32[2]{0}', space=sflag, size = 0x8, scoped, tag = 'scoped memory for tpu_custom_call.1']
    #allocation6 [shape = 's32[2]{0}', space=sflag, size = 0x8, scoped, tag = 'scoped memory for tpu_custom_call.1']
    #allocation7 [shape = 'u8[16384]{0}', space=vmem, size = 0x4000, scoped, tag = 'input window, operand 1']
    #allocation8 [shape = 's32[2]{0}', space=sflag, size = 0x8, scoped, tag = 'scoped memory for tpu_custom_call.1']
    #allocation9 [shape = 'u8[196608]{0}', space=vmem, size = 0x30000, scoped, tag = 'input window, operand 2, single buffered']
    #allocation10 [shape = 'u8[65536]{0}', space=vmem, size = 0x10000, scoped, tag = 'output window, operand 0']
    #allocation11 [shape = 'u8[65536]{0}', space=vmem, size = 0x10000, scoped, tag = 'output window, operand 1']
    #allocation12 [shape = 's32[2]{0}', space=sflag, size = 0x8, scoped, tag = 'scoped memory for tpu_custom_call.1']
    %10 = vsyncpa [#allocation5], 0
    %s11 = scalar_lea.sflag [#allocation5], 1
    %12 = vsyncpa %s11, 0
    %13 = vsyncpa [#allocation8], 0
    %s14 = scalar_lea.sflag [#allocation8], 1
    %15 = vsyncpa %s14, 0
    %16 = vsyncpa [#allocation6], 0
    %s17 = scalar_lea.sflag [#allocation6], 1
    %18 = vsyncpa %s17, 0
    %19 = vsyncpa [#allocation12], 0
    %s20 = scalar_lea.sflag [#allocation12], 1
    %21 = vsyncpa %s20, 0
    loop: start=0, step=1, limit=8
    $region2: #{tpu_custom_call.1} parent=1 // loop_pre_header
      _
    $region3: #{tpu_custom_call.1} parent=1 // loop_header
      %s23 = sphi 0, %s27
      %p24 = scmp.ge.s32.totalorder %s23, 8
      %s30 = sphi 0, %s42
      %s31 = sphi 0, %s38
      %s32 = sphi 0, %s30
      %s33 = sphi 0, %s31
      %s34 = sphi 0, %s32
      %s35 = sphi 0, %s33
      %s47 = sphi 0, %s49
      %s50 = sphi 0, %s47
      %s51 = sphi 0, %s50
      %s67 = sphi 0, %s51
      %s73 = sphi 0, %s75
      %s76 = sphi 0, %s73
      %s77 = sphi 0, %s76
      %s93 = sphi 0, %s77
      %s97 = sphi 0, %s97
      %s99 = sphi 0, %s97
      %s100 = sphi 0, %s99
      %s114 = sphi 0, %s100
      %s122 = sphi 0, %s124
      %s125 = sphi 0, %s122
      %s126 = sphi 0, %s125
      %s142 = sphi 0, %s126
      %s150 = sphi 0, %s152
      %s153 = sphi 0, %s150
      %s154 = sphi 0, %s153
      %s170 = sphi 0, %s154
    $region4: #{tpu_custom_call.1} parent=1 // loop_header_branch
      %26 = sbr.rel (%p24) target = $region8
    $region5: #{tpu_custom_call.1} parent=1 // loop_body
      %s28 = ssub.s32 %s23, 1
      %s29 = ssub.s32 %s23, 2
      %s36 = sadd.s32 1, %s31
      %p37 = scmp.ge.s32.totalorder %s36, 3
      %s38 = scalar_select %p37, 0, %s36
      %s39 = sadd.s32 1, %s30
      %s40 = scalar_select %p37, %s39, %s30
      %p41 = scmp.ge.s32.totalorder %s40, 2
      %s42 = scalar_select %p41, 0, %s40
      %s43 = ssub.s32 %s31, %s38
      %s44 = ssub.s32 %s30, %s42
      %s45 = sor.u32 %s43, %s44
      %p46 = scmp.eq.s32.totalorder %s45, 0
      %s48 = sadd.s32 %s47, 1
      %s49 = scalar_select %p46, %s47, %s48
      %p52 = pneg %p46
      %p53 = scmp.eq.s32.totalorder %s23, 5
      %p54 = por %p52, %p53
      %p55 = scmp.ne.s32.totalorder %s47, %s50
      %p56 = scmp.eq.s32.totalorder %s23, 0
      %p57 = por %p55, %p56
      %p58 = scmp.ne.s32.totalorder %s47, %s50
      %p59 = scmp.eq.s32.totalorder %s28, 5
      %p60 = por %p58, %p59
      %p61 = scmp.ne.s32.totalorder %s50, %s51
      %p62 = scmp.eq.s32.totalorder %s28, 0
      %p63 = por %p61, %p62
      %p64 = scmp.ne.s32.totalorder %s50, %s51
      %p65 = scmp.eq.s32.totalorder %s29, 5
      %p66 = por %p64, %p65
      %p68 = scmp.ne.s32.totalorder %s51, %s67
      %p69 = scmp.eq.s32.totalorder %s29, 0
      %p70 = por %p68, %p69
      %s71 = ssub.s32 %s30, %s42
      %p72 = scmp.eq.s32.totalorder %s71, 0
      %s74 = sadd.s32 %s73, 1
      %s75 = scalar_select %p72, %s73, %s74
      %p78 = pneg %p72
      %p79 = scmp.eq.s32.totalorder %s23, 5
      %p80 = por %p78, %p79
      %p81 = scmp.ne.s32.totalorder %s73, %s76
      %p82 = scmp.eq.s32.totalorder %s23, 0
      %p83 = por %p81, %p82
      %p84 = scmp.ne.s32.totalorder %s73, %s76
      %p85 = scmp.eq.s32.totalorder %s28, 5
      %p86 = por %p84, %p85
      %p87 = scmp.ne.s32.totalorder %s76, %s77
      %p88 = scmp.eq.s32.totalorder %s28, 0
      %p89 = por %p87, %p88
      %p90 = scmp.ne.s32.totalorder %s76, %s77
      %p91 = scmp.eq.s32.totalorder %s29, 5
      %p92 = por %p90, %p91
      %p94 = scmp.ne.s32.totalorder %s77, %s93
      %p95 = scmp.eq.s32.totalorder %s29, 0
      %p96 = por %p94, %p95
      %s98 = sadd.s32 %s97, 1
      %p101 = scmp.eq.s32.totalorder %s23, 5
      %p102 = scmp.ne.s32.totalorder %s97, %s99
      %p103 = scmp.eq.s32.totalorder %s23, 0
      %p104 = por %p102, %p103
      %p105 = scmp.ne.s32.totalorder %s97, %s99
      %p106 = scmp.eq.s32.totalorder %s28, 5
      %p107 = por %p105, %p106
      %p108 = scmp.ne.s32.totalorder %s99, %s100
      %p109 = scmp.eq.s32.totalorder %s28, 0
      %p110 = por %p108, %p109
      %p111 = scmp.ne.s32.totalorder %s99, %s100
      %p112 = scmp.eq.s32.totalorder %s29, 5
      %p113 = por %p111, %p112
      %p115 = scmp.ne.s32.totalorder %s100, %s114
      %p116 = scmp.eq.s32.totalorder %s29, 0
      %p117 = por %p115, %p116
      %s118 = ssub.s32 %s31, %s38
      %s119 = ssub.s32 %s30, %s42
      %s120 = sor.u32 %s118, %s119
      %p121 = scmp.eq.s32.totalorder %s120, 0
      %s123 = sadd.s32 %s122, 1
      %s124 = scalar_select %p121, %s122, %s123
      %p127 = pneg %p121
      %p128 = scmp.eq.s32.totalorder %s23, 5
      %p129 = por %p127, %p128
      %p130 = scmp.ne.s32.totalorder %s122, %s125
      %p131 = scmp.eq.s32.totalorder %s23, 0
      %p132 = por %p130, %p131
      %p133 = scmp.ne.s32.totalorder %s122, %s125
      %p134 = scmp.eq.s32.totalorder %s28, 5
      %p135 = por %p133, %p134
      %p136 = scmp.ne.s32.totalorder %s125, %s126
      %p137 = scmp.eq.s32.totalorder %s28, 0
      %p138 = por %p136, %p137
      %p139 = scmp.ne.s32.totalorder %s125, %s126
      %p140 = scmp.eq.s32.totalorder %s29, 5
      %p141 = por %p139, %p140
      %p143 = scmp.ne.s32.totalorder %s126, %s142
      %p144 = scmp.eq.s32.totalorder %s29, 0
      %p145 = por %p143, %p144
      %s146 = ssub.s32 %s31, %s38
      %s147 = ssub.s32 %s30, %s42
      %s148 = sor.u32 %s146, %s147
      %p149 = scmp.eq.s32.totalorder %s148, 0
      %s151 = sadd.s32 %s150, 1
      %s152 = scalar_select %p149, %s150, %s151
      %p155 = pneg %p149
      %p156 = scmp.eq.s32.totalorder %s23, 5
      %p157 = por %p155, %p156
      %p158 = scmp.ne.s32.totalorder %s150, %s153
      %p159 = scmp.eq.s32.totalorder %s23, 0
      %p160 = por %p158, %p159
      %p161 = scmp.ne.s32.totalorder %s150, %s153
      %p162 = scmp.eq.s32.totalorder %s28, 5
      %p163 = por %p161, %p162
      %p164 = scmp.ne.s32.totalorder %s153, %s154
      %p165 = scmp.eq.s32.totalorder %s28, 0
      %p166 = por %p164, %p165
      %p167 = scmp.ne.s32.totalorder %s153, %s154
      %p168 = scmp.eq.s32.totalorder %s29, 5
      %p169 = por %p167, %p168
      %p171 = scmp.ne.s32.totalorder %s154, %s170
      %p172 = scmp.eq.s32.totalorder %s29, 0
      %p173 = por %p171, %p172
      %p174 = scmp.le.s32.totalorder 1, %s23
      %p175 = scmp.lt.s32.totalorder %s23, 7
      %p176 = pnand %p174, %p175
      %p177 = pneg %p176
      // Predicated region
      $region9: #{tpu_custom_call.1} parent=5 // pred_check
        _
      $region10: #{tpu_custom_call.1} parent=5 // pred_check_branch
        %179 = sbr.rel (%p176) target = $region12
      $region11: #{tpu_custom_call.1} parent=5 // pred_region
        %s180 = ssub.s32 %s23, 1
        // Predicated region
        $region13: #{tpu_custom_call.1} parent=11 // pred_check
          %p181 = pneg %p110
        $region14: #{tpu_custom_call.1} parent=11 // pred_check_branch
          %183 = sbr.rel (%p181) target = $region16
        $region15: #{tpu_custom_call.1} parent=11 // pred_region
          %185 = vsyncadd [#allocation8], 0
          %s186 = sshll.u32 %s2, 4
          %s187 = int_to_ptr.hbm [resolvable:$true] %s186
          %s188 = sshll.u32 [#allocation9], 4
          %s189 = int_to_ptr.vmem [resolvable:$true] %s188
          %194 = dma.hbm_to_vmem [thread:$0]  %s187, 6144, %s189, [#allocation8], 384, 384, 24
        $region16: #{tpu_custom_call.1} parent=11 // pred_fallthru
          _
      $region12: #{tpu_custom_call.1} parent=5 // pred_fallthru
        _
      %p195 = scmp.lt.s32.totalorder %s23, 6
      // Predicated region
      $region17: #{tpu_custom_call.1} parent=5 // pred_check
        %p196 = pneg %p195
      $region18: #{tpu_custom_call.1} parent=5 // pred_check_branch
        %198 = sbr.rel (%p196) target = $region20
      $region19: #{tpu_custom_call.1} parent=5 // pred_region
        // Predicated region
        $region21: #{tpu_custom_call.1} parent=19 // pred_check
          %p199 = pneg %p57
        $region22: #{tpu_custom_call.1} parent=19 // pred_check_branch
          %201 = sbr.rel (%p199) target = $region24
        $region23: #{tpu_custom_call.1} parent=19 // pred_region
          #allocation14 [shape = 'u32[6]{0}', space=smem, size = 0x18, scoped, tag = 'DMA stride descriptor']
          %s202 = sand.u32 %s47, 1
          %s203 = scalar_lea.sflag [#allocation5], %s202
          %s204 = sand.u32 %s47, 1
          %s205 = smul.addr %s204, 192
          %s206 = scalar_lea.vmem [#allocation4], %s205
          %s207 = smul.u32 4, %s31
          %s208 = smul.u32 2, %s30
          %210 = vsyncadd %s203, 0
          %s211 = smul.addr %s208, 3
          %s212 = smul.addr %s207, 12
          %s213 = sadd.s32 %s211, %s212
          %s214 = smul.addr %s213, 8
          %s215 = scalar_lea.hbm %s0, %s214
          %s217 = sshll.u32 1, 14
          %s218 = sxor.u32 4294967295, %s217
          %s220 = sld [smem:[#allocation0]]
          %s221 = sadd.s32 2, %s220
          %s223 = sshll.u32 7, 26
          %s224 = sxor.u32 4294967295, %s223
          %s225 = sand.u32 0, %s224
          %s226 = sshll.u32 %s221, 26
          %s227 = sor.u32 %s225, %s226
          %s228 = sshll.u32 %s215, 4
          %s229 = int_to_ptr.hbm [resolvable:$true] %s228
          %s230 = sshll.u32 %s206, 4
          %s231 = int_to_ptr.vmem [resolvable:$true] %s230
          %237 = sst [smem:[#allocation14]] 1536
          %s238 = scalar_lea.smem [#allocation14], 1
          %239 = sst [smem:[%s238]] 768
          %s240 = scalar_lea.smem [#allocation14], 2
          %241 = sst [smem:[%s240]] 2
          %s242 = scalar_lea.smem [#allocation14], 3
          %243 = sst [smem:[%s242]] 384
          %s244 = scalar_lea.smem [#allocation14], 4
          %245 = sst [smem:[%s244]] 384
          %s246 = scalar_lea.smem [#allocation14], 5
          %247 = sst [smem:[%s246]] 24
          %249 = dma.general %s229, 3072, %s231, %s203, [#allocation13], [#allocation14], %s227, 0
        $region24: #{tpu_custom_call.1} parent=19 // pred_fallthru
          _
        // Predicated region
        $region25: #{tpu_custom_call.1} parent=19 // pred_check
          %p250 = pneg %p83
        $region26: #{tpu_custom_call.1} parent=19 // pred_check_branch
          %252 = sbr.rel (%p250) target = $region28
        $region27: #{tpu_custom_call.1} parent=19 // pred_region
          %s253 = sand.u32 %s23, 1
          %s254 = scalar_lea.sflag [#allocation8], %s253
          %s255 = sand.u32 %s73, 1
          %s256 = smul.addr %s255, 16
          %s257 = scalar_lea.vmem [#allocation7], %s256
          %s258 = smul.u32 2, %s30
          %260 = vsyncadd %s254, 0
          %s261 = smul.addr %s258, 8
          %s262 = scalar_lea.hbm %s1, %s261
          %s263 = sshll.u32 %s262, 4
          %s264 = int_to_ptr.hbm [resolvable:$true] %s263
          %s265 = sshll.u32 %s257, 4
          %s266 = int_to_ptr.vmem [resolvable:$true] %s265
          %271 = dma.hbm_to_vmem [thread:$0]  %s264, 256, %s266, %s254, 128, 128, 8
        $region28: #{tpu_custom_call.1} parent=19 // pred_fallthru
          _
      $region20: #{tpu_custom_call.1} parent=5 // pred_fallthru
        _
      %p272 = scmp.le.s32.totalorder 1, %s23
      %p273 = scmp.lt.s32.totalorder %s23, 7
      %p274 = pnand %p272, %p273
      %p275 = pneg %p274
      // Predicated region
      $region29: #{tpu_custom_call.1} parent=5 // pred_check
        _
      $region30: #{tpu_custom_call.1} parent=5 // pred_check_branch
        %277 = sbr.rel (%p274) target = $region32
      $region31: #{tpu_custom_call.1} parent=5 // pred_region
        %s278 = ssub.s32 %s23, 1
        %s279 = sand.u32 %s50, 1
        %s280 = scalar_lea.sflag [#allocation5], %s279
        %s281 = sand.u32 %s50, 1
        %s282 = smul.addr %s281, 192
        %s283 = scalar_lea.vmem [#allocation4], %s282
        // Predicated region
        $region33: #{tpu_custom_call.1} parent=31 // pred_check
          %p284 = pneg %p63
        $region34: #{tpu_custom_call.1} parent=31 // pred_check_branch
          %286 = sbr.rel (%p284) target = $region36
        $region35: #{tpu_custom_call.1} parent=31 // pred_region
          %288 = dma.done %s280, 3072
        $region36: #{tpu_custom_call.1} parent=31 // pred_fallthru
          _
        %s289 = sand.u32 %s28, 1
        %s290 = scalar_lea.sflag [#allocation8], %s289
        %s291 = sand.u32 %s76, 1
        %s292 = smul.addr %s291, 16
        %s293 = scalar_lea.vmem [#allocation7], %s292
        // Predicated region
        $region37: #{tpu_custom_call.1} parent=31 // pred_check
          %p294 = pneg %p89
        $region38: #{tpu_custom_call.1} parent=31 // pred_check_branch
          %296 = sbr.rel (%p294) target = $region40
        $region39: #{tpu_custom_call.1} parent=31 // pred_region
          %298 = dma.done %s290, 256
        $region40: #{tpu_custom_call.1} parent=31 // pred_fallthru
          _
        // Predicated region
        $region41: #{tpu_custom_call.1} parent=31 // pred_check
          %p299 = pneg %p110
        $region42: #{tpu_custom_call.1} parent=31 // pred_check_branch
          %301 = sbr.rel (%p299) target = $region44
        $region43: #{tpu_custom_call.1} parent=31 // pred_region
          %303 = dma.done [#allocation8], 6144
        $region44: #{tpu_custom_call.1} parent=31 // pred_fallthru
          _
        %s304 = sand.u32 %s50, 1
        %s305 = scalar_lea.sflag [#allocation5], %s304
        %s306 = sand.u32 %s50, 1
        %s307 = smul.addr %s306, 192
        %s308 = scalar_lea.vmem [#allocation4], %s307
        %p309 = pneg %p63
        %p310 = pneg %p60
        %s311 = sand.u32 %s28, 1
        %s312 = scalar_lea.sflag [#allocation8], %s311
        %s313 = sand.u32 %s76, 1
        %s314 = smul.addr %s313, 16
        %s315 = scalar_lea.vmem [#allocation7], %s314
        %p316 = pneg %p89
        %p317 = pneg %p86
        %p318 = pneg %p110
        %p319 = pneg %p107
        %p320 = pneg %p138
        %p321 = pneg %p135
        %s322 = sand.u32 %s125, 1
        %s323 = scalar_lea.sflag [#allocation6], %s322
        %s324 = sand.u32 %s125, 1
        %s325 = smul.addr %s324, 64
        %s326 = scalar_lea.vmem [#allocation10], %s325
        %p327 = pneg %p166
        %p328 = pneg %p163
        %s329 = sand.u32 %s153, 1
        %s330 = scalar_lea.sflag [#allocation12], %s329
        %s331 = sand.u32 %s153, 1
        %s332 = smul.addr %s331, 64
        %s333 = scalar_lea.vmem [#allocation11], %s332
        %s334 = smul.u32 4, %s33
        %s335 = smul.u32 2, %s32
        %s336 = smul.u32 2, %s32
        %s337 = smul.u32 4, %s33
        %s338 = smul.u32 2, %s32
        %s339 = smul.u32 4, %s33
        %s340 = smul.u32 2, %s32
        %p341 = scmp.eq.s32.totalorder %s33, 0
        // Predicated region
        $region45: #{tpu_custom_call.1} parent=31 // pred_check
          %p342 = pneg %p341
        $region46: #{tpu_custom_call.1} parent=31 // pred_check_branch
          %344 = sbr.rel (%p342) target = $region48
        $region47: #{tpu_custom_call.1} parent=31 // pred_region
          %345 = vst [vmem:[#allocation2] sm:$0xff] 0.0
          %346 = vst [vmem:[#allocation2 + $0x8] sm:$0xff] 0.0
          %347 = vst [vmem:[#allocation3] sm:$0xff] 0.0
          %348 = vst [vmem:[#allocation3 + $0x8] sm:$0xff] 0.0
        $region48: #{tpu_custom_call.1} parent=31 // pred_fallthru
          _
        %v349 = vld [vmem:[%s293] sm:$0xff]
        %v350 = vld [vmem:[%s293 + $0x8] sm:$0xff]
        %v351 = vld [vmem:[#allocation9] sm:$0xff]
        %v352 = vld [vmem:[#allocation9 + $0x8] sm:$0xff]
        %v353 = vld [vmem:[#allocation9 + $0x10] sm:$0xff]
        %v354 = vld [vmem:[#allocation9 + $0x18] sm:$0xff]
        %v355 = vld [vmem:[#allocation9 + $0x20] sm:$0xff]
        %v356 = vld [vmem:[#allocation9 + $0x28] sm:$0xff]
        %v357 = vld [vmem:[#allocation9 + $0x30] sm:$0xff]
        %v358 = vld [vmem:[#allocation9 + $0x38] sm:$0xff]
        %v359 = vld [vmem:[#allocation9 + $0x40] sm:$0xff]
        %v360 = vld [vmem:[#allocation9 + $0x48] sm:$0xff]
        %v361 = vld [vmem:[#allocation9 + $0x50] sm:$0xff]
        %v362 = vld [vmem:[#allocation9 + $0x58] sm:$0xff]
        %v363 = vld [vmem:[#allocation9 + $0x60] sm:$0xff]
        %v364 = vld [vmem:[#allocation9 + $0x68] sm:$0xff]
        %v365 = vld [vmem:[#allocation9 + $0x70] sm:$0xff]
        %v366 = vld [vmem:[#allocation9 + $0x78] sm:$0xff]
        %v367 = vld [vmem:[#allocation9 + $0x80] sm:$0xff]
        %v368 = vld [vmem:[#allocation9 + $0x88] sm:$0xff]
        %v369 = vld [vmem:[#allocation9 + $0x90] sm:$0xff]
        %v370 = vld [vmem:[#allocation9 + $0x98] sm:$0xff]
        %v371 = vld [vmem:[#allocation9 + $0xa0] sm:$0xff]
        %v372 = vld [vmem:[#allocation9 + $0xa8] sm:$0xff]
        %v373 = vld [vmem:[#allocation9 + $0xb0] sm:$0xff]
        %v374 = vld [vmem:[#allocation9 + $0xb8] sm:$0xff]
        %v375 = vld [vmem:[#allocation9 + $0xc0] sm:$0xff]
        %v376 = vld [vmem:[#allocation9 + $0xc8] sm:$0xff]
        %v377 = vld [vmem:[#allocation9 + $0xd0] sm:$0xff]
        %v378 = vld [vmem:[#allocation9 + $0xd8] sm:$0xff]
        %v379 = vld [vmem:[#allocation9 + $0xe0] sm:$0xff]
        %v380 = vld [vmem:[#allocation9 + $0xe8] sm:$0xff]
        %v381 = vld [vmem:[#allocation9 + $0xf0] sm:$0xff]
        %v382 = vld [vmem:[#allocation9 + $0xf8] sm:$0xff]
        %v383 = vld [vmem:[#allocation9 + $0x100] sm:$0xff]
        %v384 = vld [vmem:[#allocation9 + $0x108] sm:$0xff]
        %v385 = vld [vmem:[#allocation9 + $0x110] sm:$0xff]
        %v386 = vld [vmem:[#allocation9 + $0x118] sm:$0xff]
        %v387 = vld [vmem:[#allocation9 + $0x120] sm:$0xff]
        %v388 = vld [vmem:[#allocation9 + $0x128] sm:$0xff]
        %v389 = vld [vmem:[#allocation9 + $0x130] sm:$0xff]
        %v390 = vld [vmem:[#allocation9 + $0x138] sm:$0xff]
        %v391 = vld [vmem:[#allocation9 + $0x140] sm:$0xff]
        %v392 = vld [vmem:[#allocation9 + $0x148] sm:$0xff]
        %v393 = vld [vmem:[#allocation9 + $0x150] sm:$0xff]
        %v394 = vld [vmem:[#allocation9 + $0x158] sm:$0xff]
        %v395 = vld [vmem:[#allocation9 + $0x160] sm:$0xff]
        %v396 = vld [vmem:[#allocation9 + $0x168] sm:$0xff]
        %v397 = vld [vmem:[#allocation9 + $0x170] sm:$0xff]
        %v398 = vld [vmem:[#allocation9 + $0x178] sm:$0xff]
        %v399 = vld [vmem:[#allocation2] sm:$0xff]
        %v400 = vld [vmem:[#allocation2 + $0x8] sm:$0xff]
        %v401 = vld [vmem:[%s283] sm:$0xff]
        %v402 = vld [vmem:[%s283 + $0x8] sm:$0xff]
        %v403 = vld [vmem:[%s283 + $0x10] sm:$0xff]
        %v404 = vld [vmem:[%s283 + $0x18] sm:$0xff]
        %v405 = vld [vmem:[%s283 + $0x20] sm:$0xff]
        %v406 = vld [vmem:[%s283 + $0x28] sm:$0xff]
        %407 = vmatpush.msra.mxu0 %v396
        %408 = vmatpush.msra.mxu0 %v393
        %409 = vmatpush.msra.mxu0 %v390
        %410 = vmatpush.msra.mxu0 %v387
        %411 = vmatpush.msra.mxu0 %v384
        %412 = vmatpush.msra.mxu0 %v381
        %413 = vmatpush.msra.mxu0 %v378
        %414 = vmatpush.msra.mxu0 %v375
        %415 = vmatpush.msra.mxu0 %v372
        %416 = vmatpush.msra.mxu0 %v369
        %417 = vmatpush.msra.mxu0 %v366
        %418 = vmatpush.msra.mxu0 %v363
        %419 = vmatpush.msra.mxu0 %v360
        %420 = vmatpush.msra.mxu0 %v357
        %421 = vmatpush.msra.mxu0 %v354
        %422 = vmatpush.msra.mxu0 %v351
        %423 = vmatmul.f32.gmra.mxu0 %v399
        %v424 = vpop.f32.mrf.mxu0
        %v425 = vadd.f32 %v401, %v424
        %426 = vmatmul.f32.gmra.mxu0 %v400
        %v427 = vpop.f32.mrf.mxu0
        %v428 = vadd.f32 %v404, %v427
        %429 = vdwg.mxu0
        %430 = vmatpush.msra.mxu0 %v397
        %431 = vmatpush.msra.mxu0 %v394
        %432 = vmatpush.msra.mxu0 %v391
        %433 = vmatpush.msra.mxu0 %v388
        %434 = vmatpush.msra.mxu0 %v385
        %435 = vmatpush.msra.mxu0 %v382
        %436 = vmatpush.msra.mxu0 %v379
        %437 = vmatpush.msra.mxu0 %v376
        %438 = vmatpush.msra.mxu0 %v373
        %439 = vmatpush.msra.mxu0 %v370
        %440 = vmatpush.msra.mxu0 %v367
        %441 = vmatpush.msra.mxu0 %v364
        %442 = vmatpush.msra.mxu0 %v361
        %443 = vmatpush.msra.mxu0 %v358
        %444 = vmatpush.msra.mxu0 %v355
        %445 = vmatpush.msra.mxu0 %v352
        %446 = vmatmul.f32.gmra.mxu0 %v399
        %v447 = vpop.f32.mrf.mxu0
        %v448 = vadd.f32 %v402, %v447
        %449 = vmatmul.f32.gmra.mxu0 %v400
        %v450 = vpop.f32.mrf.mxu0
        %v451 = vadd.f32 %v405, %v450
        %452 = vdwg.mxu0
        %453 = vmatpush.msra.mxu0 %v398
        %454 = vmatpush.msra.mxu0 %v395
        %455 = vmatpush.msra.mxu0 %v392
        %456 = vmatpush.msra.mxu0 %v389
        %457 = vmatpush.msra.mxu0 %v386
        %458 = vmatpush.msra.mxu0 %v383
        %459 = vmatpush.msra.mxu0 %v380
        %460 = vmatpush.msra.mxu0 %v377
        %461 = vmatpush.msra.mxu0 %v374
        %462 = vmatpush.msra.mxu0 %v371
        %463 = vmatpush.msra.mxu0 %v368
        %464 = vmatpush.msra.mxu0 %v365
        %465 = vmatpush.msra.mxu0 %v362
        %466 = vmatpush.msra.mxu0 %v359
        %467 = vmatpush.msra.mxu0 %v356
        %468 = vmatpush.msra.mxu0 %v353
        %469 = vmatmul.f32.gmra.mxu0 %v399
        %v470 = vpop.f32.mrf.mxu0
        %v471 = vadd.f32 %v403, %v470
        %472 = vmatmul.f32.gmra.mxu0 %v400
        %v473 = vpop.f32.mrf.mxu0
        %v474 = vadd.f32 %v406, %v473
        %475 = vdwg.mxu0
        %v476 = vxor.u32 %v425, 2147483648
        %v477 = vxor.u32 %v448, 2147483648
        %v478 = vxor.u32 %v428, 2147483648
        %v479 = vxor.u32 %v451, 2147483648
        %v480 = vmul.f32 %v476, 1.442695
        %v481 = vpow.pop %v480
        %v482 = vmul.f32 %v477, 1.442695
        %v483 = vpow.pop %v482
        %v484 = vmul.f32 %v478, 1.442695
        %v485 = vpow.pop %v484
        %v486 = vmul.f32 %v479, 1.442695
        %v487 = vpow.pop %v486
        %v488 = vadd.f32 %v481, 1.0
        %v489 = vadd.f32 %v483, 1.0
        %v490 = vadd.f32 %v485, 1.0
        %v491 = vadd.f32 %v487, 1.0
        %v492 = vrcp.pop %v488
        %v493 = vmul.f32 %v488, %v492
        %v494 = vsub.f32 1.0, %v493
        %v495 = vmul.f32 %v492, %v494
        %v496 = vadd.f32 %v492, %v495
        %vm497 = vweird.f32 %v488
        %vm498 = vweird.f32 %v492
        %vm499 = vmor %vm497, %vm498
        %v500 = vsel %vm499, %v492, %v496
        %v501 = vand.u32 2147483647, %v488
        %vm502 = vcmp.eq.f32.partialorder %v501, 8.507059e+37
        %v503 = vand.u32 %v488, 2147483648
        %v504 = vor.u32 1.1754944e-38, %v503
        %v505 = vsel %vm502, %v504, %v500
        %v506 = vmul.f32 1.0, %v505
        %v507 = vrcp.pop %v489
        %v508 = vmul.f32 %v489, %v507
        %v509 = vsub.f32 1.0, %v508
        %v510 = vmul.f32 %v507, %v509
        %v511 = vadd.f32 %v507, %v510
        %vm512 = vweird.f32 %v489
        %vm513 = vweird.f32 %v507
        %vm514 = vmor %vm512, %vm513
        %v515 = vsel %vm514, %v507, %v511
        %v516 = vand.u32 2147483647, %v489
        %vm517 = vcmp.eq.f32.partialorder %v516, 8.507059e+37
        %v518 = vand.u32 %v489, 2147483648
        %v519 = vor.u32 1.1754944e-38, %v518
        %v520 = vsel %vm517, %v519, %v515
        %v521 = vmul.f32 1.0, %v520
        %v522 = vrcp.pop %v490
        %v523 = vmul.f32 %v490, %v522
        %v524 = vsub.f32 1.0, %v523
        %v525 = vmul.f32 %v522, %v524
        %v526 = vadd.f32 %v522, %v525
        %vm527 = vweird.f32 %v490
        %vm528 = vweird.f32 %v522
        %vm529 = vmor %vm527, %vm528
        %v530 = vsel %vm529, %v522, %v526
        %v531 = vand.u32 2147483647, %v490
        %vm532 = vcmp.eq.f32.partialorder %v531, 8.507059e+37
        %v533 = vand.u32 %v490, 2147483648
        %v534 = vor.u32 1.1754944e-38, %v533
        %v535 = vsel %vm532, %v534, %v530
        %v536 = vmul.f32 1.0, %v535
        %v537 = vrcp.pop %v491
        %v538 = vmul.f32 %v491, %v537
        %v539 = vsub.f32 1.0, %v538
        %v540 = vmul.f32 %v537, %v539
        %v541 = vadd.f32 %v537, %v540
        %vm542 = vweird.f32 %v491
        %vm543 = vweird.f32 %v537
        %vm544 = vmor %vm542, %vm543
        %v545 = vsel %vm544, %v537, %v541
        %v546 = vand.u32 2147483647, %v491
        %vm547 = vcmp.eq.f32.partialorder %v546, 8.507059e+37
        %v548 = vand.u32 %v491, 2147483648
        %v549 = vor.u32 1.1754944e-38, %v548
        %v550 = vsel %vm547, %v549, %v545
        %v551 = vmul.f32 1.0, %v550
        %v552 = vtanh.pop %v471
        %v553 = vtanh.pop %v474
        %v554 = vld [vmem:[#allocation3] sm:$0xff]
        %v555 = vld [vmem:[#allocation3 + $0x8] sm:$0xff]
        %v556 = vmul.f32 %v506, %v554
        %v557 = vmul.f32 %v536, %v555
        %v558 = vmul.f32 %v349, %v552
        %v559 = vmul.f32 %v350, %v553
        %v560 = vadd.f32 %v556, %v558
        %v561 = vadd.f32 %v557, %v559
        %v562 = vtanh.pop %v560
        %v563 = vtanh.pop %v561
        %v564 = vmul.f32 %v521, %v562
        %v565 = vmul.f32 %v551, %v563
        %566 = vst [vmem:[#allocation2] sm:$0xff] %v564
        %567 = vst [vmem:[#allocation2 + $0x8] sm:$0xff] %v565
        %568 = vst [vmem:[#allocation3] sm:$0xff] %v560
        %569 = vst [vmem:[#allocation3 + $0x8] sm:$0xff] %v561
        %570 = vst [vmem:[%s326] sm:$0xff] %v564
        %571 = vst [vmem:[%s326 + $0x8] sm:$0xff] %v565
        %572 = vst [vmem:[%s333] sm:$0xff] %v560
        %573 = vst [vmem:[%s333 + $0x8] sm:$0xff] %v561
        %v574 = vld [vmem:[#allocation2] sm:$0xff]
        %v575 = vld [vmem:[#allocation2 + $0x8] sm:$0xff]
        %s576 = scalar_lea.vmem %s283, 48 [#allocation4]
        %v577 = vld [vmem:[%s576] sm:$0xff]
        %v578 = vld [vmem:[%s576 + $0x8] sm:$0xff]
        %v579 = vld [vmem:[%s576 + $0x10] sm:$0xff]
        %v580 = vld [vmem:[%s576 + $0x18] sm:$0xff]
        %v581 = vld [vmem:[%s576 + $0x20] sm:$0xff]
        %v582 = vld [vmem:[%s576 + $0x28] sm:$0xff]
        %583 = vmatpush.msra.mxu0 %v396
        %584 = vmatpush.msra.mxu0 %v393
        %585 = vmatpush.msra.mxu0 %v390
        %586 = vmatpush.msra.mxu0 %v387
        %587 = vmatpush.msra.mxu0 %v384
        %588 = vmatpush.msra.mxu0 %v381
        %589 = vmatpush.msra.mxu0 %v378
        %590 = vmatpush.msra.mxu0 %v375
        %591 = vmatpush.msra.mxu0 %v372
        %592 = vmatpush.msra.mxu0 %v369
        %593 = vmatpush.msra.mxu0 %v366
        %594 = vmatpush.msra.mxu0 %v363
        %595 = vmatpush.msra.mxu0 %v360
        %596 = vmatpush.msra.mxu0 %v357
        %597 = vmatpush.msra.mxu0 %v354
        %598 = vmatpush.msra.mxu0 %v351
        %599 = vmatmul.f32.gmra.mxu0 %v574
        %v600 = vpop.f32.mrf.mxu0
        %v601 = vadd.f32 %v577, %v600
        %602 = vmatmul.f32.gmra.mxu0 %v575
        %v603 = vpop.f32.mrf.mxu0
        %v604 = vadd.f32 %v580, %v603
        %605 = vdwg.mxu0
        %606 = vmatpush.msra.mxu0 %v397
        %607 = vmatpush.msra.mxu0 %v394
        %608 = vmatpush.msra.mxu0 %v391
        %609 = vmatpush.msra.mxu0 %v388
        %610 = vmatpush.msra.mxu0 %v385
        %611 = vmatpush.msra.mxu0 %v382
        %612 = vmatpush.msra.mxu0 %v379
        %613 = vmatpush.msra.mxu0 %v376
        %614 = vmatpush.msra.mxu0 %v373
        %615 = vmatpush.msra.mxu0 %v370
        %616 = vmatpush.msra.mxu0 %v367
        %617 = vmatpush.msra.mxu0 %v364
        %618 = vmatpush.msra.mxu0 %v361
        %619 = vmatpush.msra.mxu0 %v358
        %620 = vmatpush.msra.mxu0 %v355
        %621 = vmatpush.msra.mxu0 %v352
        %622 = vmatmul.f32.gmra.mxu0 %v574
        %v623 = vpop.f32.mrf.mxu0
        %v624 = vadd.f32 %v578, %v623
        %625 = vmatmul.f32.gmra.mxu0 %v575
        %v626 = vpop.f32.mrf.mxu0
        %v627 = vadd.f32 %v581, %v626
        %628 = vdwg.mxu0
        %629 = vmatpush.msra.mxu0 %v398
        %630 = vmatpush.msra.mxu0 %v395
        %631 = vmatpush.msra.mxu0 %v392
        %632 = vmatpush.msra.mxu0 %v389
        %633 = vmatpush.msra.mxu0 %v386
        %634 = vmatpush.msra.mxu0 %v383
        %635 = vmatpush.msra.mxu0 %v380
        %636 = vmatpush.msra.mxu0 %v377
        %637 = vmatpush.msra.mxu0 %v374
        %638 = vmatpush.msra.mxu0 %v371
        %639 = vmatpush.msra.mxu0 %v368
        %640 = vmatpush.msra.mxu0 %v365
        %641 = vmatpush.msra.mxu0 %v362
        %642 = vmatpush.msra.mxu0 %v359
        %643 = vmatpush.msra.mxu0 %v356
        %644 = vmatpush.msra.mxu0 %v353
        %645 = vmatmul.f32.gmra.mxu0 %v574
        %v646 = vpop.f32.mrf.mxu0
        %v647 = vadd.f32 %v579, %v646
        %648 = vmatmul.f32.gmra.mxu0 %v575
        %v649 = vpop.f32.mrf.mxu0
        %v650 = vadd.f32 %v582, %v649
        %651 = vdwg.mxu0
        %v652 = vxor.u32 %v601, 2147483648
        %v653 = vxor.u32 %v624, 2147483648
        %v654 = vxor.u32 %v604, 2147483648
        %v655 = vxor.u32 %v627, 2147483648
        %v656 = vmul.f32 %v652, 1.442695
        %v657 = vpow.pop %v656
        %v658 = vmul.f32 %v653, 1.442695
        %v659 = vpow.pop %v658
        %v660 = vmul.f32 %v654, 1.442695
        %v661 = vpow.pop %v660
        %v662 = vmul.f32 %v655, 1.442695
        %v663 = vpow.pop %v662
        %v664 = vadd.f32 %v657, 1.0
        %v665 = vadd.f32 %v659, 1.0
        %v666 = vadd.f32 %v661, 1.0
        %v667 = vadd.f32 %v663, 1.0
        %v668 = vrcp.pop %v664
        %v669 = vmul.f32 %v664, %v668
        %v670 = vsub.f32 1.0, %v669
        %v671 = vmul.f32 %v668, %v670
        %v672 = vadd.f32 %v668, %v671
        %vm673 = vweird.f32 %v664
        %vm674 = vweird.f32 %v668
        %vm675 = vmor %vm673, %vm674
        %v676 = vsel %vm675, %v668, %v672
        %v677 = vand.u32 2147483647, %v664
        %vm678 = vcmp.eq.f32.partialorder %v677, 8.507059e+37
        %v679 = vand.u32 %v664, 2147483648
        %v680 = vor.u32 1.1754944e-38, %v679
        %v681 = vsel %vm678, %v680, %v676
        %v682 = vmul.f32 1.0, %v681
        %v683 = vrcp.pop %v665
        %v684 = vmul.f32 %v665, %v683
        %v685 = vsub.f32 1.0, %v684
        %v686 = vmul.f32 %v683, %v685
        %v687 = vadd.f32 %v683, %v686
        %vm688 = vweird.f32 %v665
        %vm689 = vweird.f32 %v683
        %vm690 = vmor %vm688, %vm689
        %v691 = vsel %vm690, %v683, %v687
        %v692 = vand.u32 2147483647, %v665
        %vm693 = vcmp.eq.f32.partialorder %v692, 8.507059e+37
        %v694 = vand.u32 %v665, 2147483648
        %v695 = vor.u32 1.1754944e-38, %v694
        %v696 = vsel %vm693, %v695, %v691
        %v697 = vmul.f32 1.0, %v696
        %v698 = vrcp.pop %v666
        %v699 = vmul.f32 %v666, %v698
        %v700 = vsub.f32 1.0, %v699
        %v701 = vmul.f32 %v698, %v700
        %v702 = vadd.f32 %v698, %v701
        %vm703 = vweird.f32 %v666
        %vm704 = vweird.f32 %v698
        %vm705 = vmor %vm703, %vm704
        %v706 = vsel %vm705, %v698, %v702
        %v707 = vand.u32 2147483647, %v666
        %vm708 = vcmp.eq.f32.partialorder %v707, 8.507059e+37
        %v709 = vand.u32 %v666, 2147483648
        %v710 = vor.u32 1.1754944e-38, %v709
        %v711 = vsel %vm708, %v710, %v706
        %v712 = vmul.f32 1.0, %v711
        %v713 = vrcp.pop %v667
        %v714 = vmul.f32 %v667, %v713
        %v715 = vsub.f32 1.0, %v714
        %v716 = vmul.f32 %v713, %v715
        %v717 = vadd.f32 %v713, %v716
        %vm718 = vweird.f32 %v667
        %vm719 = vweird.f32 %v713
        %vm720 = vmor %vm718, %vm719
        %v721 = vsel %vm720, %v713, %v717
        %v722 = vand.u32 2147483647, %v667
        %vm723 = vcmp.eq.f32.partialorder %v722, 8.507059e+37
        %v724 = vand.u32 %v667, 2147483648
        %v725 = vor.u32 1.1754944e-38, %v724
        %v726 = vsel %vm723, %v725, %v721
        %v727 = vmul.f32 1.0, %v726
        %v728 = vtanh.pop %v647
        %v729 = vtanh.pop %v650
        %v730 = vld [vmem:[#allocation3] sm:$0xff]
        %v731 = vld [vmem:[#allocation3 + $0x8] sm:$0xff]
        %v732 = vmul.f32 %v682, %v730
        %v733 = vmul.f32 %v712, %v731
        %v734 = vmul.f32 %v349, %v728
        %v735 = vmul.f32 %v350, %v729
        %v736 = vadd.f32 %v732, %v734
        %v737 = vadd.f32 %v733, %v735
        %v738 = vtanh.pop %v736
        %v739 = vtanh.pop %v737
        %v740 = vmul.f32 %v697, %v738
        %v741 = vmul.f32 %v727, %v739
        %742 = vst [vmem:[#allocation2] sm:$0xff] %v740
        %743 = vst [vmem:[#allocation2 + $0x8] sm:$0xff] %v741
        %744 = vst [vmem:[#allocation3] sm:$0xff] %v736
        %745 = vst [vmem:[#allocation3 + $0x8] sm:$0xff] %v737
        %s746 = scalar_lea.vmem %s326, 16 [#allocation10]
        %747 = vst [vmem:[%s746] sm:$0xff] %v740
        %748 = vst [vmem:[%s746 + $0x8] sm:$0xff] %v741
        %s749 = scalar_lea.vmem %s333, 16 [#allocation11]
        %750 = vst [vmem:[%s749] sm:$0xff] %v736
        %751 = vst [vmem:[%s749 + $0x8] sm:$0xff] %v737
        %v752 = vld [vmem:[#allocation2] sm:$0xff]
        %v753 = vld [vmem:[#allocation2 + $0x8] sm:$0xff]
        %s754 = scalar_lea.vmem %s283, 96 [#allocation4]
        %v755 = vld [vmem:[%s754] sm:$0xff]
        %v756 = vld [vmem:[%s754 + $0x8] sm:$0xff]
        %v757 = vld [vmem:[%s754 + $0x10] sm:$0xff]
        %v758 = vld [vmem:[%s754 + $0x18] sm:$0xff]
        %v759 = vld [vmem:[%s754 + $0x20] sm:$0xff]
        %v760 = vld [vmem:[%s754 + $0x28] sm:$0xff]
        %761 = vmatpush.msra.mxu0 %v396
        %762 = vmatpush.msra.mxu0 %v393
        %763 = vmatpush.msra.mxu0 %v390
        %764 = vmatpush.msra.mxu0 %v387
        %765 = vmatpush.msra.mxu0 %v384
        %766 = vmatpush.msra.mxu0 %v381
        %767 = vmatpush.msra.mxu0 %v378
        %768 = vmatpush.msra.mxu0 %v375
        %769 = vmatpush.msra.mxu0 %v372
        %770 = vmatpush.msra.mxu0 %v369
        %771 = vmatpush.msra.mxu0 %v366
        %772 = vmatpush.msra.mxu0 %v363
        %773 = vmatpush.msra.mxu0 %v360
        %774 = vmatpush.msra.mxu0 %v357
        %775 = vmatpush.msra.mxu0 %v354
        %776 = vmatpush.msra.mxu0 %v351
        %777 = vmatmul.f32.gmra.mxu0 %v752
        %v778 = vpop.f32.mrf.mxu0
        %v779 = vadd.f32 %v755, %v778
        %780 = vmatmul.f32.gmra.mxu0 %v753
        %v781 = vpop.f32.mrf.mxu0
        %v782 = vadd.f32 %v758, %v781
        %783 = vdwg.mxu0
        %784 = vmatpush.msra.mxu0 %v397
        %785 = vmatpush.msra.mxu0 %v394
        %786 = vmatpush.msra.mxu0 %v391
        %787 = vmatpush.msra.mxu0 %v388
        %788 = vmatpush.msra.mxu0 %v385
        %789 = vmatpush.msra.mxu0 %v382
        %790 = vmatpush.msra.mxu0 %v379
        %791 = vmatpush.msra.mxu0 %v376
        %792 = vmatpush.msra.mxu0 %v373
        %793 = vmatpush.msra.mxu0 %v370
        %794 = vmatpush.msra.mxu0 %v367
        %795 = vmatpush.msra.mxu0 %v364
        %796 = vmatpush.msra.mxu0 %v361
        %797 = vmatpush.msra.mxu0 %v358
        %798 = vmatpush.msra.mxu0 %v355
        %799 = vmatpush.msra.mxu0 %v352
        %800 = vmatmul.f32.gmra.mxu0 %v752
        %v801 = vpop.f32.mrf.mxu0
        %v802 = vadd.f32 %v756, %v801
        %803 = vmatmul.f32.gmra.mxu0 %v753
        %v804 = vpop.f32.mrf.mxu0
        %v805 = vadd.f32 %v759, %v804
        %806 = vdwg.mxu0
        %807 = vmatpush.msra.mxu0 %v398
        %808 = vmatpush.msra.mxu0 %v395
        %809 = vmatpush.msra.mxu0 %v392
        %810 = vmatpush.msra.mxu0 %v389
        %811 = vmatpush.msra.mxu0 %v386
        %812 = vmatpush.msra.mxu0 %v383
        %813 = vmatpush.msra.mxu0 %v380
        %814 = vmatpush.msra.mxu0 %v377
        %815 = vmatpush.msra.mxu0 %v374
        %816 = vmatpush.msra.mxu0 %v371
        %817 = vmatpush.msra.mxu0 %v368
        %818 = vmatpush.msra.mxu0 %v365
        %819 = vmatpush.msra.mxu0 %v362
        %820 = vmatpush.msra.mxu0 %v359
        %821 = vmatpush.msra.mxu0 %v356
        %822 = vmatpush.msra.mxu0 %v353
        %823 = vmatmul.f32.gmra.mxu0 %v752
        %v824 = vpop.f32.mrf.mxu0
        %v825 = vadd.f32 %v757, %v824
        %826 = vmatmul.f32.gmra.mxu0 %v753
        %v827 = vpop.f32.mrf.mxu0
        %v828 = vadd.f32 %v760, %v827
        %829 = vdwg.mxu0
        %v830 = vxor.u32 %v779, 2147483648
        %v831 = vxor.u32 %v802, 2147483648
        %v832 = vxor.u32 %v782, 2147483648
        %v833 = vxor.u32 %v805, 2147483648
        %v834 = vmul.f32 %v830, 1.442695
        %v835 = vpow.pop %v834
        %v836 = vmul.f32 %v831, 1.442695
        %v837 = vpow.pop %v836
        %v838 = vmul.f32 %v832, 1.442695
        %v839 = vpow.pop %v838
        %v840 = vmul.f32 %v833, 1.442695
        %v841 = vpow.pop %v840
        %v842 = vadd.f32 %v835, 1.0
        %v843 = vadd.f32 %v837, 1.0
        %v844 = vadd.f32 %v839, 1.0
        %v845 = vadd.f32 %v841, 1.0
        %v846 = vrcp.pop %v842
        %v847 = vmul.f32 %v842, %v846
        %v848 = vsub.f32 1.0, %v847
        %v849 = vmul.f32 %v846, %v848
        %v850 = vadd.f32 %v846, %v849
        %vm851 = vweird.f32 %v842
        %vm852 = vweird.f32 %v846
        %vm853 = vmor %vm851, %vm852
        %v854 = vsel %vm853, %v846, %v850
        %v855 = vand.u32 2147483647, %v842
        %vm856 = vcmp.eq.f32.partialorder %v855, 8.507059e+37
        %v857 = vand.u32 %v842, 2147483648
        %v858 = vor.u32 1.1754944e-38, %v857
        %v859 = vsel %vm856, %v858, %v854
        %v860 = vmul.f32 1.0, %v859
        %v861 = vrcp.pop %v843
        %v862 = vmul.f32 %v843, %v861
        %v863 = vsub.f32 1.0, %v862
        %v864 = vmul.f32 %v861, %v863
        %v865 = vadd.f32 %v861, %v864
        %vm866 = vweird.f32 %v843
        %vm867 = vweird.f32 %v861
        %vm868 = vmor %vm866, %vm867
        %v869 = vsel %vm868, %v861, %v865
        %v870 = vand.u32 2147483647, %v843
        %vm871 = vcmp.eq.f32.partialorder %v870, 8.507059e+37
        %v872 = vand.u32 %v843, 2147483648
        %v873 = vor.u32 1.1754944e-38, %v872
        %v874 = vsel %vm871, %v873, %v869
        %v875 = vmul.f32 1.0, %v874
        %v876 = vrcp.pop %v844
        %v877 = vmul.f32 %v844, %v876
        %v878 = vsub.f32 1.0, %v877
        %v879 = vmul.f32 %v876, %v878
        %v880 = vadd.f32 %v876, %v879
        %vm881 = vweird.f32 %v844
        %vm882 = vweird.f32 %v876
        %vm883 = vmor %vm881, %vm882
        %v884 = vsel %vm883, %v876, %v880
        %v885 = vand.u32 2147483647, %v844
        %vm886 = vcmp.eq.f32.partialorder %v885, 8.507059e+37
        %v887 = vand.u32 %v844, 2147483648
        %v888 = vor.u32 1.1754944e-38, %v887
        %v889 = vsel %vm886, %v888, %v884
        %v890 = vmul.f32 1.0, %v889
        %v891 = vrcp.pop %v845
        %v892 = vmul.f32 %v845, %v891
        %v893 = vsub.f32 1.0, %v892
        %v894 = vmul.f32 %v891, %v893
        %v895 = vadd.f32 %v891, %v894
        %vm896 = vweird.f32 %v845
        %vm897 = vweird.f32 %v891
        %vm898 = vmor %vm896, %vm897
        %v899 = vsel %vm898, %v891, %v895
        %v900 = vand.u32 2147483647, %v845
        %vm901 = vcmp.eq.f32.partialorder %v900, 8.507059e+37
        %v902 = vand.u32 %v845, 2147483648
        %v903 = vor.u32 1.1754944e-38, %v902
        %v904 = vsel %vm901, %v903, %v899
        %v905 = vmul.f32 1.0, %v904
        %v906 = vtanh.pop %v825
        %v907 = vtanh.pop %v828
        %v908 = vld [vmem:[#allocation3] sm:$0xff]
        %v909 = vld [vmem:[#allocation3 + $0x8] sm:$0xff]
        %v910 = vmul.f32 %v860, %v908
        %v911 = vmul.f32 %v890, %v909
        %v912 = vmul.f32 %v349, %v906
        %v913 = vmul.f32 %v350, %v907
        %v914 = vadd.f32 %v910, %v912
        %v915 = vadd.f32 %v911, %v913
        %v916 = vtanh.pop %v914
        %v917 = vtanh.pop %v915
        %v918 = vmul.f32 %v875, %v916
        %v919 = vmul.f32 %v905, %v917
        %920 = vst [vmem:[#allocation2] sm:$0xff] %v918
        %921 = vst [vmem:[#allocation2 + $0x8] sm:$0xff] %v919
        %922 = vst [vmem:[#allocation3] sm:$0xff] %v914
        %923 = vst [vmem:[#allocation3 + $0x8] sm:$0xff] %v915
        %s924 = scalar_lea.vmem %s326, 32 [#allocation10]
        %925 = vst [vmem:[%s924] sm:$0xff] %v918
        %926 = vst [vmem:[%s924 + $0x8] sm:$0xff] %v919
        %s927 = scalar_lea.vmem %s333, 32 [#allocation11]
        %928 = vst [vmem:[%s927] sm:$0xff] %v914
        %929 = vst [vmem:[%s927 + $0x8] sm:$0xff] %v915
        %v930 = vld [vmem:[#allocation2] sm:$0xff]
        %v931 = vld [vmem:[#allocation2 + $0x8] sm:$0xff]
        %s932 = scalar_lea.vmem %s283, 144 [#allocation4]
        %v933 = vld [vmem:[%s932] sm:$0xff]
        %v934 = vld [vmem:[%s932 + $0x8] sm:$0xff]
        %v935 = vld [vmem:[%s932 + $0x10] sm:$0xff]
        %v936 = vld [vmem:[%s932 + $0x18] sm:$0xff]
        %v937 = vld [vmem:[%s932 + $0x20] sm:$0xff]
        %v938 = vld [vmem:[%s932 + $0x28] sm:$0xff]
        %939 = vmatpush.msra.mxu0 %v396
        %940 = vmatpush.msra.mxu0 %v393
        %941 = vmatpush.msra.mxu0 %v390
        %942 = vmatpush.msra.mxu0 %v387
        %943 = vmatpush.msra.mxu0 %v384
        %944 = vmatpush.msra.mxu0 %v381
        %945 = vmatpush.msra.mxu0 %v378
        %946 = vmatpush.msra.mxu0 %v375
        %947 = vmatpush.msra.mxu0 %v372
        %948 = vmatpush.msra.mxu0 %v369
        %949 = vmatpush.msra.mxu0 %v366
        %950 = vmatpush.msra.mxu0 %v363
        %951 = vmatpush.msra.mxu0 %v360
        %952 = vmatpush.msra.mxu0 %v357
        %953 = vmatpush.msra.mxu0 %v354
        %954 = vmatpush.msra.mxu0 %v351
        %955 = vmatmul.f32.gmra.mxu0 %v930
        %v956 = vpop.f32.mrf.mxu0
        %v957 = vadd.f32 %v933, %v956
        %958 = vmatmul.f32.gmra.mxu0 %v931
        %v959 = vpop.f32.mrf.mxu0
        %v960 = vadd.f32 %v936, %v959
        %961 = vdwg.mxu0
        %962 = vmatpush.msra.mxu0 %v397
        %963 = vmatpush.msra.mxu0 %v394
        %964 = vmatpush.msra.mxu0 %v391
        %965 = vmatpush.msra.mxu0 %v388
        %966 = vmatpush.msra.mxu0 %v385
        %967 = vmatpush.msra.mxu0 %v382
        %968 = vmatpush.msra.mxu0 %v379
        %969 = vmatpush.msra.mxu0 %v376
        %970 = vmatpush.msra.mxu0 %v373
        %971 = vmatpush.msra.mxu0 %v370
        %972 = vmatpush.msra.mxu0 %v367
        %973 = vmatpush.msra.mxu0 %v364
        %974 = vmatpush.msra.mxu0 %v361
        %975 = vmatpush.msra.mxu0 %v358
        %976 = vmatpush.msra.mxu0 %v355
        %977 = vmatpush.msra.mxu0 %v352
        %978 = vmatmul.f32.gmra.mxu0 %v930
        %v979 = vpop.f32.mrf.mxu0
        %v980 = vadd.f32 %v934, %v979
        %981 = vmatmul.f32.gmra.mxu0 %v931
        %v982 = vpop.f32.mrf.mxu0
        %v983 = vadd.f32 %v937, %v982
        %984 = vdwg.mxu0
        %985 = vmatpush.msra.mxu0 %v398
        %986 = vmatpush.msra.mxu0 %v395
        %987 = vmatpush.msra.mxu0 %v392
        %988 = vmatpush.msra.mxu0 %v389
        %989 = vmatpush.msra.mxu0 %v386
        %990 = vmatpush.msra.mxu0 %v383
        %991 = vmatpush.msra.mxu0 %v380
        %992 = vmatpush.msra.mxu0 %v377
        %993 = vmatpush.msra.mxu0 %v374
        %994 = vmatpush.msra.mxu0 %v371
        %995 = vmatpush.msra.mxu0 %v368
        %996 = vmatpush.msra.mxu0 %v365
        %997 = vmatpush.msra.mxu0 %v362
        %998 = vmatpush.msra.mxu0 %v359
        %999 = vmatpush.msra.mxu0 %v356
        %1000 = vmatpush.msra.mxu0 %v353
        %1001 = vmatmul.f32.gmra.mxu0 %v930
        %v1002 = vpop.f32.mrf.mxu0
        %v1003 = vadd.f32 %v935, %v1002
        %1004 = vmatmul.f32.gmra.mxu0 %v931
        %v1005 = vpop.f32.mrf.mxu0
        %v1006 = vadd.f32 %v938, %v1005
        %1007 = vdwg.mxu0
        %v1008 = vxor.u32 %v957, 2147483648
        %v1009 = vxor.u32 %v980, 2147483648
        %v1010 = vxor.u32 %v960, 2147483648
        %v1011 = vxor.u32 %v983, 2147483648
        %v1012 = vmul.f32 %v1008, 1.442695
        %v1013 = vpow.pop %v1012
        %v1014 = vmul.f32 %v1009, 1.442695
        %v1015 = vpow.pop %v1014
        %v1016 = vmul.f32 %v1010, 1.442695
        %v1017 = vpow.pop %v1016
        %v1018 = vmul.f32 %v1011, 1.442695
        %v1019 = vpow.pop %v1018
        %v1020 = vadd.f32 %v1013, 1.0
        %v1021 = vadd.f32 %v1015, 1.0
        %v1022 = vadd.f32 %v1017, 1.0
        %v1023 = vadd.f32 %v1019, 1.0
        %v1024 = vrcp.pop %v1020
        %v1025 = vmul.f32 %v1020, %v1024
        %v1026 = vsub.f32 1.0, %v1025
        %v1027 = vmul.f32 %v1024, %v1026
        %v1028 = vadd.f32 %v1024, %v1027
        %vm1029 = vweird.f32 %v1020
        %vm1030 = vweird.f32 %v1024
        %vm1031 = vmor %vm1029, %vm1030
        %v1032 = vsel %vm1031, %v1024, %v1028
        %v1033 = vand.u32 2147483647, %v1020
        %vm1034 = vcmp.eq.f32.partialorder %v1033, 8.507059e+37
        %v1035 = vand.u32 %v1020, 2147483648
        %v1036 = vor.u32 1.1754944e-38, %v1035
        %v1037 = vsel %vm1034, %v1036, %v1032
        %v1038 = vmul.f32 1.0, %v1037
        %v1039 = vrcp.pop %v1021
        %v1040 = vmul.f32 %v1021, %v1039
        %v1041 = vsub.f32 1.0, %v1040
        %v1042 = vmul.f32 %v1039, %v1041
        %v1043 = vadd.f32 %v1039, %v1042
        %vm1044 = vweird.f32 %v1021
        %vm1045 = vweird.f32 %v1039
        %vm1046 = vmor %vm1044, %vm1045
        %v1047 = vsel %vm1046, %v1039, %v1043
        %v1048 = vand.u32 2147483647, %v1021
        %vm1049 = vcmp.eq.f32.partialorder %v1048, 8.507059e+37
        %v1050 = vand.u32 %v1021, 2147483648
        %v1051 = vor.u32 1.1754944e-38, %v1050
        %v1052 = vsel %vm1049, %v1051, %v1047
        %v1053 = vmul.f32 1.0, %v1052
        %v1054 = vrcp.pop %v1022
        %v1055 = vmul.f32 %v1022, %v1054
        %v1056 = vsub.f32 1.0, %v1055
        %v1057 = vmul.f32 %v1054, %v1056
        %v1058 = vadd.f32 %v1054, %v1057
        %vm1059 = vweird.f32 %v1022
        %vm1060 = vweird.f32 %v1054
        %vm1061 = vmor %vm1059, %vm1060
        %v1062 = vsel %vm1061, %v1054, %v1058
        %v1063 = vand.u32 2147483647, %v1022
        %vm1064 = vcmp.eq.f32.partialorder %v1063, 8.507059e+37
        %v1065 = vand.u32 %v1022, 2147483648
        %v1066 = vor.u32 1.1754944e-38, %v1065
        %v1067 = vsel %vm1064, %v1066, %v1062
        %v1068 = vmul.f32 1.0, %v1067
        %v1069 = vrcp.pop %v1023
        %v1070 = vmul.f32 %v1023, %v1069
        %v1071 = vsub.f32 1.0, %v1070
        %v1072 = vmul.f32 %v1069, %v1071
        %v1073 = vadd.f32 %v1069, %v1072
        %vm1074 = vweird.f32 %v1023
        %vm1075 = vweird.f32 %v1069
        %vm1076 = vmor %vm1074, %vm1075
        %v1077 = vsel %vm1076, %v1069, %v1073
        %v1078 = vand.u32 2147483647, %v1023
        %vm1079 = vcmp.eq.f32.partialorder %v1078, 8.507059e+37
        %v1080 = vand.u32 %v1023, 2147483648
        %v1081 = vor.u32 1.1754944e-38, %v1080
        %v1082 = vsel %vm1079, %v1081, %v1077
        %v1083 = vmul.f32 1.0, %v1082
        %v1084 = vtanh.pop %v1003
        %v1085 = vtanh.pop %v1006
        %v1086 = vld [vmem:[#allocation3] sm:$0xff]
        %v1087 = vld [vmem:[#allocation3 + $0x8] sm:$0xff]
        %v1088 = vmul.f32 %v1038, %v1086
        %v1089 = vmul.f32 %v1068, %v1087
        %v1090 = vmul.f32 %v349, %v1084
        %v1091 = vmul.f32 %v350, %v1085
        %v1092 = vadd.f32 %v1088, %v1090
        %v1093 = vadd.f32 %v1089, %v1091
        %v1094 = vtanh.pop %v1092
        %v1095 = vtanh.pop %v1093
        %v1096 = vmul.f32 %v1053, %v1094
        %v1097 = vmul.f32 %v1083, %v1095
        %1098 = vst [vmem:[#allocation2] sm:$0xff] %v1096
        %1099 = vst [vmem:[#allocation2 + $0x8] sm:$0xff] %v1097
        %1100 = vst [vmem:[#allocation3] sm:$0xff] %v1092
        %1101 = vst [vmem:[#allocation3 + $0x8] sm:$0xff] %v1093
        %s1102 = scalar_lea.vmem %s326, 48 [#allocation10]
        %1103 = vst [vmem:[%s1102] sm:$0xff] %v1096
        %1104 = vst [vmem:[%s1102 + $0x8] sm:$0xff] %v1097
        %s1105 = scalar_lea.vmem %s333, 48 [#allocation11]
        %1106 = vst [vmem:[%s1105] sm:$0xff] %v1092
        %1107 = vst [vmem:[%s1105 + $0x8] sm:$0xff] %v1093
        %s1108 = sand.u32 %s125, 1
        %s1109 = scalar_lea.sflag [#allocation6], %s1108
        %s1110 = sand.u32 %s125, 1
        %s1111 = smul.addr %s1110, 64
        %s1112 = scalar_lea.vmem [#allocation10], %s1111
        %s1113 = sand.u32 %s153, 1
        %s1114 = scalar_lea.sflag [#allocation12], %s1113
        %s1115 = sand.u32 %s153, 1
        %s1116 = smul.addr %s1115, 64
        %s1117 = scalar_lea.vmem [#allocation11], %s1116
        // Predicated region
        $region49: #{tpu_custom_call.1} parent=31 // pred_check
          %p1118 = pneg %p135
        $region50: #{tpu_custom_call.1} parent=31 // pred_check_branch
          %1120 = sbr.rel (%p1118) target = $region52
        $region51: #{tpu_custom_call.1} parent=31 // pred_region
          #allocation16 [shape = 'u32[6]{0}', space=smem, size = 0x18, scoped, tag = 'DMA stride descriptor']
          %s1121 = smul.u32 4, %s33
          %s1122 = smul.u32 2, %s32
          %1124 = vsyncadd %s1109, 0
          %s1125 = smul.addr %s1121, 4
          %s1126 = sadd.s32 %s1122, %s1125
          %s1127 = smul.addr %s1126, 8
          %s1128 = scalar_lea.hbm %s3, %s1127
          %s1130 = sshll.u32 1, 14
          %s1131 = sxor.u32 4294967295, %s1130
          %s1134 = sshll.u32 7, 18
          %s1135 = sxor.u32 4294967295, %s1134
          %s1136 = sand.u32 0, %s1135
          %s1138 = sor.u32 %s1136, 0
          %s1139 = sshll.u32 %s1112, 4
          %s1140 = int_to_ptr.vmem [resolvable:$true] %s1139
          %s1141 = sshll.u32 %s1128, 4
          %s1142 = int_to_ptr.hbm [resolvable:$true] %s1141
          %1148 = sst [smem:[#allocation16]] 256
          %s1149 = scalar_lea.smem [#allocation16], 1
          %1150 = sst [smem:[%s1149]] 512
          %s1151 = scalar_lea.smem [#allocation16], 2
          %1152 = sst [smem:[%s1151]] 2
          %s1153 = scalar_lea.smem [#allocation16], 3
          %1154 = sst [smem:[%s1153]] 128
          %s1155 = scalar_lea.smem [#allocation16], 4
          %1156 = sst [smem:[%s1155]] 128
          %s1157 = scalar_lea.smem [#allocation16], 5
          %1158 = sst [smem:[%s1157]] 8
          %1160 = dma.general %s1140, 1024, %s1142, %s1109, [#allocation15], [#allocation16], %s1138, 0
        $region52: #{tpu_custom_call.1} parent=31 // pred_fallthru
          _
        // Predicated region
        $region53: #{tpu_custom_call.1} parent=31 // pred_check
          %p1161 = pneg %p163
        $region54: #{tpu_custom_call.1} parent=31 // pred_check_branch
          %1163 = sbr.rel (%p1161) target = $region56
        $region55: #{tpu_custom_call.1} parent=31 // pred_region
          #allocation18 [shape = 'u32[6]{0}', space=smem, size = 0x18, scoped, tag = 'DMA stride descriptor']
          %s1164 = smul.u32 4, %s33
          %s1165 = smul.u32 2, %s32
          %1167 = vsyncadd %s1114, 0
          %s1168 = smul.addr %s1164, 4
          %s1169 = sadd.s32 %s1165, %s1168
          %s1170 = smul.addr %s1169, 8
          %s1171 = scalar_lea.hbm %s4, %s1170
          %s1173 = sshll.u32 1, 14
          %s1174 = sxor.u32 4294967295, %s1173
          %s1177 = sshll.u32 7, 18
          %s1178 = sxor.u32 4294967295, %s1177
          %s1179 = sand.u32 0, %s1178
          %s1181 = sor.u32 %s1179, 0
          %s1182 = sshll.u32 %s1117, 4
          %s1183 = int_to_ptr.vmem [resolvable:$true] %s1182
          %s1184 = sshll.u32 %s1171, 4
          %s1185 = int_to_ptr.hbm [resolvable:$true] %s1184
          %1191 = sst [smem:[#allocation18]] 256
          %s1192 = scalar_lea.smem [#allocation18], 1
          %1193 = sst [smem:[%s1192]] 512
          %s1194 = scalar_lea.smem [#allocation18], 2
          %1195 = sst [smem:[%s1194]] 2
          %s1196 = scalar_lea.smem [#allocation18], 3
          %1197 = sst [smem:[%s1196]] 128
          %s1198 = scalar_lea.smem [#allocation18], 4
          %1199 = sst [smem:[%s1198]] 128
          %s1200 = scalar_lea.smem [#allocation18], 5
          %1201 = sst [smem:[%s1200]] 8
          %1203 = dma.general %s1183, 1024, %s1185, %s1114, [#allocation17], [#allocation18], %s1181, 0
        $region56: #{tpu_custom_call.1} parent=31 // pred_fallthru
          _
      $region32: #{tpu_custom_call.1} parent=5 // pred_fallthru
        _
      %p1204 = scmp.le.s32.totalorder 2, %s23
      // Predicated region
      $region57: #{tpu_custom_call.1} parent=5 // pred_check
        %p1205 = pneg %p1204
      $region58: #{tpu_custom_call.1} parent=5 // pred_check_branch
        %1207 = sbr.rel (%p1205) target = $region60
      $region59: #{tpu_custom_call.1} parent=5 // pred_region
        %s1208 = ssub.s32 %s23, 2
        // Predicated region
        $region61: #{tpu_custom_call.1} parent=59 // pred_check
          %p1209 = pneg %p141
        $region62: #{tpu_custom_call.1} parent=59 // pred_check_branch
          %1211 = sbr.rel (%p1209) target = $region64
        $region63: #{tpu_custom_call.1} parent=59 // pred_region
          %s1212 = sand.u32 %s126, 1
          %s1213 = scalar_lea.sflag [#allocation6], %s1212
          %s1214 = sand.u32 %s126, 1
          %s1215 = smul.addr %s1214, 64
          %s1216 = scalar_lea.vmem [#allocation10], %s1215
          %1218 = dma.done %s1213, 1024
        $region64: #{tpu_custom_call.1} parent=59 // pred_fallthru
          _
        // Predicated region
        $region65: #{tpu_custom_call.1} parent=59 // pred_check
          %p1219 = pneg %p169
        $region66: #{tpu_custom_call.1} parent=59 // pred_check_branch
          %1221 = sbr.rel (%p1219) target = $region68
        $region67: #{tpu_custom_call.1} parent=59 // pred_region
          %s1222 = sand.u32 %s154, 1
          %s1223 = scalar_lea.sflag [#allocation12], %s1222
          %s1224 = sand.u32 %s154, 1
          %s1225 = smul.addr %s1224, 64
          %s1226 = scalar_lea.vmem [#allocation11], %s1225
          %1228 = dma.done %s1223, 1024
        $region68: #{tpu_custom_call.1} parent=59 // pred_fallthru
          _
      $region60: #{tpu_custom_call.1} parent=5 // pred_fallthru
        _
    $region6: #{tpu_custom_call.1} parent=1 // loop_footer
      %s27 = sadd.s32 1, %s23
    $region7: #{tpu_custom_call.1} parent=1 // loop_footer_branch
      %22 = sbr.rel target = $region3
    $region8: #{tpu_custom_call.1} parent=1 // loop_exit
      _
    %1229 = vsyncpa [#allocation5], 1
    %s1230 = scalar_lea.sflag [#allocation5], 1
    %1231 = vsyncpa %s1230, 1
    %1232 = vsyncpa [#allocation8], 1
    %s1233 = scalar_lea.sflag [#allocation8], 1
    %1234 = vsyncpa %s1233, 1
    %1235 = vsyncpa [#allocation6], 1
    %s1236 = scalar_lea.sflag [#allocation6], 1
    %1237 = vsyncpa %s1236, 1
    %1238 = vsyncpa [#allocation12], 1
    %s1239 = scalar_lea.sflag [#allocation12], 1
    %1240 = vsyncpa %s1239, 1

</llo_original>
